<compile_context>
chip_gen: v6e
topology: v6e:2x2x1
jax: 0.10.0
libtpu: 0.0.40
codegen_flags: <defaults>
</compile_context>

<pallas_src>
from functools import partial

import jax
import jax.numpy as jnp
import numpy as np
from jax.experimental import pallas as pl
from jax.experimental.pallas import tpu as pltpu

LANES = 128
WQ_ALIGN = 16          # padded row width alignment: keeps bf16 band loads tile-aligned


def _round_up(x, m):
    return ((x + m - 1) // m) * m


def _vmem_capacity_bytes():
    try:
        info = pltpu.get_tpu_info()
        cap = getattr(info, "vmem_capacity_bytes", None)
        if cap:
            return int(cap)
    except Exception:
        pass
    return 128 * 1024 * 1024


_VMEM_CAP = _vmem_capacity_bytes()
_VMEM_LIMIT = min((_VMEM_CAP * 3) // 4, 100 * 1024 * 1024)   # scoped-VMEM cap w/ headroom
_TILE_BUDGET = (_VMEM_LIMIT * 3) // 5                        # per-kernel working-set budget


def _pick_tn(n):
    if n <= 256:
        return n
    return 256 if n % 256 == 0 else LANES


def _pick_tm(M, per_row_bytes, fixed_bytes=0, budget=None):
    """Largest row tile dividing M that fits the dtype-aware VMEM budget.

    per_row_bytes: bytes per M-row summed over grid-varying (double-buffered) operands;
    fixed_bytes: grid-invariant operands (weights / bias)."""
    budget = _TILE_BUDGET if budget is None else budget
    for tm in (2048, 1024, 512, 256, 128, 64, 32, 16, 8):
        if M % tm == 0 and fixed_bytes + 2 * tm * per_row_bytes <= budget:
            return tm
    return M  # tiny / oddly-shaped M fallback


def _compiler_params(sem):
    return pltpu.CompilerParams(dimension_semantics=sem, vmem_limit_bytes=_VMEM_LIMIT)


# ----------------------------------------------------------------------------
# Pallas kernels
# ----------------------------------------------------------------------------
def _conv1_kernel(x_ref, w_ref, b_ref, m_ref, o_ref):
    # 1x1 conv + bn1 (folded) + relu, written straight into the padded slab geometry.
    x = x_ref[...].astype(w_ref.dtype)                          # f32 -> bf16 in-VMEM
    y = jnp.dot(x, w_ref[...], preferred_element_type=jnp.float32) + b_ref[...]
    y = jnp.maximum(y, 0.0) * m_ref[...]                        # zero the halo (conv2 padding)
    o_ref[...] = y.astype(o_ref.dtype)


def _conv1_xt_kernel(x_ref, w_ref, b_ref, m_ref, xt_ref, o_ref):
    # Same as above with the transformer-branch add (x + x_t) fused into the epilogue.
    x = x_ref[...].astype(w_ref.dtype)
    y = jnp.dot(x, w_ref[...], preferred_element_type=jnp.float32) + b_ref[...]
    y = jnp.maximum(y, 0.0) * m_ref[...]
    y = y + xt_ref[...].astype(jnp.float32)
    o_ref[...] = y.astype(o_ref.dtype)


def _conv2_kernel(h_ref, w_ref, b_ref, o_ref, *, th, Wq):
    # One output row-band (th image rows x full padded width Wq) per grid step.
    # Tap operands are aligned contiguous band loads (one per kh); the kw shift is applied
    # to the f32 matmul result with an XLU sublane roll; roll wrap positions land only in
    # halo columns, which are never read downstream.
    L = th * Wq
    Co = w_ref.shape[2]
    base = pl.multiple_of(pl.program_id(1) * L, 8)
    acc = jnp.zeros((L, Co), jnp.float32)
    for kh in range(3):
        band = h_ref[0, pl.ds(base + kh * Wq, L), :]            # (L, C) bf16, aligned
        for kw in range(3):
            p = jnp.dot(band, w_ref[kh * 3 + kw], preferred_element_type=jnp.float32)
            if kw != 1:
                p = pltpu.roll(p, (1 - kw) % L, axis=0)
            acc = acc + p
    o_ref[0] = jnp.maximum(acc + b_ref[...], 0.0).astype(o_ref.dtype)


def _conv3_kernel(x2_ref, w3_ref, r_ref, wr_ref, b_ref, o_ref):
    # conv3 + bn3 (folded) + residual (identity injection OR residual-conv) + final ReLU.
    y = jnp.dot(x2_ref[...], w3_ref[...], preferred_element_type=jnp.float32)
    y = y + jnp.dot(r_ref[...], wr_ref[...], preferred_element_type=jnp.float32)
    y = y + b_ref[...]
    o_ref[...] = jnp.maximum(y, 0.0).astype(o_ref.dtype)


# ----------------------------------------------------------------------------
# pallas_call wrappers
# ----------------------------------------------------------------------------
def conv1_matmul(x, w, b, mask, xt=None):
    """(M, Cin) @ (Cin, med_p) + b -> ReLU -> *mask [-> + x_t], bf16 output."""
    M, K = x.shape
    _, Np = w.shape
    tn = _pick_tn(Np)
    per_row = K * x.dtype.itemsize + 4 + tn * w.dtype.itemsize
    if xt is not None:
        per_row += tn * xt.dtype.itemsize
    fixed = K * tn * w.dtype.itemsize + tn * 4
    tm = _pick_tm(M, per_row, fixed)
    grid = (M // tm, Np // tn)

    in_specs = [
        pl.BlockSpec((tm, K), lambda i, j: (i, 0)),
        pl.BlockSpec((K, tn), lambda i, j: (0, j)),
        pl.BlockSpec((1, tn), lambda i, j: (0, j)),
        pl.BlockSpec((tm, 1), lambda i, j: (i, 0)),
    ]
    args = [x, w, b.reshape(1, Np), mask]
    kernel = _conv1_kernel
    if xt is not None:
        in_specs.append(pl.BlockSpec((tm, tn), lambda i, j: (i, j)))
        args.append(xt)
        kernel = _conv1_xt_kernel

    return pl.pallas_call(
        kernel,
        out_shape=jax.ShapeDtypeStruct((M, Np), w.dtype),
        grid=grid,
        in_specs=in_specs,
        out_specs=pl.BlockSpec((tm, tn), lambda i, j: (i, j)),
        compiler_params=_compiler_params(("parallel", "parallel")),
    )(*args)


def conv2_3x3(h_slab, w2, b2, *, N, Hi, Hb, Wq, th):
    """Fused 3x3 conv (pad=1, stride=1) + bn2 (folded) + ReLU over the padded slab."""
    Cm = w2.shape[2]
    T = Hb // th
    L = th * Wq
    need = (2 * Hi * Wq * Cm * h_slab.dtype.itemsize        # image block (double-buffered)
            + 9 * Cm * Cm * w2.dtype.itemsize               # resident weights
            + 2 * L * Cm * h_slab.dtype.itemsize            # output bands
            + L * Cm * 4)                                    # f32 accumulator
    assert need <= _VMEM_LIMIT, (
        "conv2 working set exceeds VMEM; TODO(synk): halo row-band DMA for very large images")
    return pl.pallas_call(
        partial(_conv2_kernel, th=th, Wq=Wq),
        out_shape=jax.ShapeDtypeStruct((N, Hb * Wq, Cm), w2.dtype),
        grid=(N, T),
        in_specs=[
            pl.BlockSpec((1, Hi * Wq, Cm), lambda n, t: (n, 0, 0)),   # fetched once per image
            pl.BlockSpec((9, Cm, Cm), lambda n, t: (0, 0, 0)),        # grid-invariant weights
            pl.BlockSpec((1, Cm), lambda n, t: (0, 0)),
        ],
        out_specs=pl.BlockSpec((1, L, Cm), lambda n, t: (n, t, 0)),
        compiler_params=_compiler_params(("parallel", "arbitrary")),
    )(h_slab, w2, b2.reshape(1, Cm))


def conv3_fused(x2, w3, xres, wr, b):
    """Fused conv3: x2 @ w3 + xres @ wr + b -> ReLU (residual never round-trips HBM)."""
    M, Km = x2.shape
    _, Np = w3.shape
    Kr = xres.shape[1]
    tn = _pick_tn(Np)
    per_row = Km * x2.dtype.itemsize + Kr * 4 + tn * 4
    fixed = Km * tn * w3.dtype.itemsize + Kr * tn * 4 + tn * 4
    tm = _pick_tm(M, per_row, fixed)
    grid = (M // tm, Np // tn)
    return pl.pallas_call(
        _conv3_kernel,
        out_shape=jax.ShapeDtypeStruct((M, Np), jnp.float32),
        grid=grid,
        in_specs=[
            pl.BlockSpec((tm, Km), lambda i, j: (i, 0)),
            pl.BlockSpec((Km, tn), lambda i, j: (0, j)),
            pl.BlockSpec((tm, Kr), lambda i, j: (i, 0)),
            pl.BlockSpec((Kr, tn), lambda i, j: (0, j)),
            pl.BlockSpec((1, tn), lambda i, j: (0, j)),
        ],
        out_specs=pl.BlockSpec((tm, tn), lambda i, j: (i, j)),
        compiler_params=_compiler_params(("parallel", "parallel")),
    )(x2, w3, xres, wr, b.reshape(1, Np))


# ----------------------------------------------------------------------------
# Parameters: fold eval-mode BN (eps=1e-6) into conv weights; pad channels to 128 lanes.
# ----------------------------------------------------------------------------
def fold_bn(gamma, beta, mean, var, eps=1e-6):
    s = gamma / jnp.sqrt(var + eps)
    return s, beta - mean * s


def _pad_last(a, n):
    return jnp.pad(a, [(0, 0)] * (a.ndim - 1) + [(0, n - a.shape[-1])])


def make_params(key, inplanes, outplanes, res_conv=False, compute_dtype=jnp.bfloat16):
    med = outplanes // 2
    med_p = _round_up(med, LANES)
    out_p = _round_up(outplanes, LANES)
    ks = jax.random.split(key, 8)

    w1_t = jax.random.normal(ks[0], (med, inplanes, 1, 1), jnp.float32) * 0.1
    w2_t = jax.random.normal(ks[1], (med, med, 3, 3), jnp.float32) * 0.1
    w3_t = jax.random.normal(ks[2], (outplanes, med, 1, 1), jnp.float32) * 0.1

    def bn(k, c):
        g = 1.0 + 0.1 * jax.random.normal(k, (c,), jnp.float32)
        b = 0.1 * jax.random.normal(jax.random.fold_in(k, 1), (c,), jnp.float32)
        m = 0.05 * jax.random.normal(jax.random.fold_in(k, 2), (c,), jnp.float32)
        v = 1.0 + 0.1 * jnp.abs(jax.random.normal(jax.random.fold_in(k, 3), (c,), jnp.float32))
        return fold_bn(g, b, m, v, eps=1e-6)           # BatchNorm2d(eps=1e-06), eval mode

    s1, c1 = bn(ks[3], med)
    s2, c2 = bn(ks[4], med)
    s3, c3 = bn(ks[5], outplanes)

    w1 = w1_t.reshape(med, inplanes).T * s1[None, :]
    w2 = jnp.transpose(w2_t, (2, 3, 1, 0)).reshape(9, med, med) * s2[None, None, :]
    w2 = jnp.pad(w2, ((0, 0), (0, med_p - med), (0, med_p - med)))
    w3 = w3_t.reshape(outplanes, med).T * s3[None, :]
    w3 = jnp.pad(w3, ((0, med_p - med), (0, out_p - outplanes)))

    params = {
        "w1": _pad_last(w1, med_p).astype(compute_dtype),
        "b1": _pad_last(c1, med_p),                      # f32 biases
        "w2": w2.astype(compute_dtype),
        "b2": _pad_last(c2, med_p),
        "w3": w3.astype(compute_dtype),
        "b3": _pad_last(c3, out_p),
        "med": med, "outp": outplanes, "med_p": med_p, "out_p": out_p,
        # reference-path (f32, unpadded) parameters
        "_w1_t": w1_t, "_w2_t": w2_t, "_w3_t": w3_t,
        "ref_s1": s1, "ref_c1": c1, "ref_s2": s2, "ref_c2": c2,
        "ref_s3": s3, "ref_c3": c3,
    }
    if res_conv:
        wr_t = jax.random.normal(ks[6], (outplanes, inplanes, 1, 1), jnp.float32) * 0.1
        sr, cr = bn(ks[7], outplanes)
        wr = wr_t.reshape(outplanes, inplanes).T * sr[None, :]
        params.update({
            "wr": _pad_last(wr, out_p),                  # f32: fused residual matmul operand
            "br": _pad_last(cr, out_p),
            "_wr_t": wr_t, "ref_sr": sr, "ref_cr": cr,
        })
    return params


# ----------------------------------------------------------------------------
# ConvBlock forward (Pallas kernels + thin layout glue)
# ----------------------------------------------------------------------------
def conv_block_forward(x_nchw, params, *, stride=1, res_conv=False,
                       x_t=None, return_x_2=True):
    if stride != 1:
        # TODO(synk): stride>1 conv2 / strided residual subsample not implemented.
        raise NotImplementedError("stride != 1 not supported by the Pallas path")
    # TODO(synk): groups>1 conv2 not implemented (module default groups=1).
    N, Cin, H, W = x_nchw.shape
    med, outp = params["med"], params["outp"]
    med_p, out_p = params["med_p"], params["out_p"]
    if not res_conv:
        assert Cin == outp, "identity residual requires inplanes == outplanes"

    # Padded-slab geometry: image pixel (r, w) lives at slab row r+1, col w+1 of an
    # (Hi, Wq) grid (zeros elsewhere), row-flattened so every conv2 tap is an aligned band
    # matmul.  conv2's output / conv3 / residual use the same grid without the 1-row offset.
    Wq = _round_up(W + 2, WQ_ALIGN)
    th = max(1, 128 // Wq)                # conv2 row-band -> ~128 matmul rows per tap
    Hb = _round_up(H, th)
    Hi = _round_up(Hb + 2, 8)
    M1 = N * Hi * Wq
    M3 = N * Hb * Wq

    # --- lay the small-channel input into the padded geometry (one cheap XLA pass) ---
    # TODO(synk): NCHW<->NHWC boundary transposes kept for PyTorch layout parity.
    x_nhwc = jnp.transpose(x_nchw, (0, 2, 3, 1))
    xA = jnp.pad(x_nhwc, ((0, 0), (1, Hi - H - 1), (1, Wq - W - 1), (0, 0)))
    x_flat = xA.reshape(M1, Cin)

    # interior mask (1 on real pixels): keeps the conv1 slab's halo exactly zero in-kernel
    mrow = jnp.pad(jnp.ones((H, W), jnp.float32), ((1, Hi - H - 1), (1, Wq - W - 1)))
    mask = jnp.broadcast_to(mrow.reshape(1, Hi * Wq), (N, Hi * Wq)).reshape(M1, 1)

    xt_flat = None
    if x_t is not None:
        xt_nhwc = jnp.transpose(x_t, (0, 2, 3, 1))
        xt_pad = jnp.pad(xt_nhwc, ((0, 0), (1, Hi - H - 1), (1, Wq - W - 1),
                                   (0, med_p - x_t.shape[1])))
        xt_flat = xt_pad.reshape(M1, med_p).astype(params["w1"].dtype)

    # --- conv1 (1x1) + bn1 + relu [+ x_t], written straight into the padded slab ---
    h = conv1_matmul(x_flat, params["w1"], params["b1"], mask, xt_flat)   # (M1, med_p) bf16
    h_slab = h.reshape(N, Hi * Wq, med_p)

    # --- conv2 (3x3, pad=1) + bn2 + relu: fused, row-band tiled, copy-free taps ---
    x2 = conv2_3x3(h_slab, params["w2"], params["b2"], N=N, Hi=Hi, Hb=Hb, Wq=Wq, th=th)
    x2_flat = x2.reshape(M3, med_p)

    # --- residual operand in the output geometry (original f32 values, unpadded lanes) ---
    xres = xA[:, 1:Hb + 1, :, :].reshape(M3, Cin)
    if res_conv:
        wr = params["wr"]
        b = params["b3"] + params["br"]
    else:
        wr = jnp.eye(Cin, out_p, dtype=jnp.float32)    # identity injection (exact f32 add)
        b = params["b3"]

    # --- conv3 (1x1) + bn3 + residual + final relu: single fused kernel ---
    out = conv3_fused(x2_flat, params["w3"], xres, wr, b)                 # (M3, out_p) f32

    out_nchw = jnp.transpose(
        out.reshape(N, Hb, Wq, out_p)[:, :H, 1:W + 1, :outp], (0, 3, 1, 2))
    if not return_x_2:
        return out_nchw
    x2_nchw = jnp.transpose(
        x2.reshape(N, Hb, Wq, med_p)[:, :H, 1:W + 1, :med], (0, 3, 1, 2)).astype(x_nchw.dtype)
    return out_nchw, x2_nchw


# ----------------------------------------------------------------------------
# Pure-JAX f32 reference (eval-mode BN) for correctness checking
# ----------------------------------------------------------------------------
def reference_forward(x_nchw, params, *, stride=1, res_conv=False, x_t=None):
    def conv(x, w, stride=1, pad=0):
        return jax.lax.conv_general_dilated(
            x, w, (stride, stride), [(pad, pad), (pad, pad)],
            dimension_numbers=("NCHW", "OIHW", "NCHW"))

    def affine(x, s, b):
        return x * s[None, :, None, None] + b[None, :, None, None]

    h = jax.nn.relu(affine(conv(x_nchw, params["_w1_t"]),
                           params["ref_s1"], params["ref_c1"]))
    h2 = h if x_t is None else h + x_t
    x2 = jax.nn.relu(affine(conv(h2, params["_w2_t"], stride=stride, pad=1),
                            params["ref_s2"], params["ref_c2"]))
    y = affine(conv(x2, params["_w3_t"]), params["ref_s3"], params["ref_c3"])
    if res_conv:
        r = affine(conv(x_nchw, params["_wr_t"], stride=stride),
                   params["ref_sr"], params["ref_cr"])
    else:
        r = x_nchw
    return jax.nn.relu(y + r), x2


# TODO(synk): drop_block / drop_path are None in the default module config; not implemented.
if __name__ == "__main__":
    key = jax.random.PRNGKey(0)
    kx1, kp1, kx2, kp2, kt = jax.random.split(key, 5)
    # bf16 compute in the kernels vs f32 reference -> loose-ish tolerances.
    RTOL, ATOL = 5e-2, 5e-2

    # --- Config A: identity residual (stride=1, inplanes == outplanes), no x_t ---
    N, INP, OUTP, H, W = 2, 8, 8, 16, 16
    x = jax.random.normal(kx1, (N, INP, H, W), jnp.float32)
    params = make_params(kp1, INP, OUTP, res_conv=False)
    out, x2 = conv_block_forward(x, params, stride=1, res_conv=False)
    out = jax.block_until_ready(out)
    x2 = jax.block_until_ready(x2)
    ref_out, ref_x2 = reference_forward(x, params, stride=1, res_conv=False)
    np.testing.assert_allclose(np.asarray(out), np.asarray(ref_out), rtol=RTOL, atol=ATOL)
    np.testing.assert_allclose(np.asarray(x2), np.asarray(ref_x2), rtol=RTOL, atol=ATOL)

    # --- Config B: residual conv + transformer-branch add (x_t), inplanes != outplanes ---
    N, INP, OUTP, H, W = 2, 4, 16, 16, 16
    MED = OUTP // 2
    x = jax.random.normal(kx2, (N, INP, H, W), jnp.float32)
    x_t = 0.5 * jax.random.normal(kt, (N, MED, H, W), jnp.float32)
    params = make_params(kp2, INP, OUTP, res_conv=True)
    out, x2 = conv_block_forward(x, params, stride=1, res_conv=True, x_t=x_t)
    out = jax.block_until_ready(out)
    x2 = jax.block_until_ready(x2)
    ref_out, ref_x2 = reference_forward(x, params, stride=1, res_conv=True, x_t=x_t)
    np.testing.assert_allclose(np.asarray(out), np.asarray(ref_out), rtol=RTOL, atol=ATOL)
    np.testing.assert_allclose(np.asarray(x2), np.asarray(ref_x2), rtol=RTOL, atol=ATOL)

    print("KERNEL_OK")
</pallas_src>

<mosaic_0001>
module attributes {stable_mosaic.version = 11 : i64} {
  func.func @_conv1_kernel(%arg0: i32, %arg1: i32, %arg2: memref<512x8xf32, #tpu.memory_space<vmem>>, %arg3: memref<8x128xbf16, #tpu.memory_space<vmem>>, %arg4: memref<1x128xf32, #tpu.memory_space<vmem>>, %arg5: memref<512x1xf32, #tpu.memory_space<vmem>>, %arg6: memref<512x128xbf16, #tpu.memory_space<vmem>>) attributes {dimension_semantics = [#tpu.dimension_semantics<parallel>, #tpu.dimension_semantics<parallel>], iteration_bounds = array<i64: 3, 1>, scalar_prefetch = 0 : i64, scratch_operands = 0 : i64, tpu.core_type = #tpu.core_type<tc>, window_params = [{transform_indices = @transform_0, window_bounds = array<i64: 512, 8>}, {transform_indices = @transform_1, window_bounds = array<i64: 8, 128>}, {transform_indices = @transform_2, window_bounds = array<i64: 1, 128>}, {transform_indices = @transform_3, window_bounds = array<i64: 512, 1>}, {transform_indices = @transform_4, window_bounds = array<i64: 512, 128>}]} {
    %c0 = arith.constant 0 : index
    %c0_0 = arith.constant 0 : index
    %0 = vector.load %arg2[%c0, %c0_0] : memref<512x8xf32, #tpu.memory_space<vmem>>, vector<512x8xf32>
    %1 = arith.truncf %0 : vector<512x8xf32> to vector<512x8xbf16>
    %c0_1 = arith.constant 0 : index
    %c0_2 = arith.constant 0 : index
    %2 = vector.load %arg3[%c0_1, %c0_2] : memref<8x128xbf16, #tpu.memory_space<vmem>>, vector<8x128xbf16>
    %cst = arith.constant dense<0.000000e+00> : vector<512x128xf32>
    %3 = tpu.matmul %1, %2, %cst {dimension_numbers = #tpu.dot_dimension_numbers<[1], [0], [0], [1], [0, 0, 1, 1], [], []>} : vector<512x8xbf16>, vector<8x128xbf16>, vector<512x128xf32> -> vector<512x128xf32>
    %c0_3 = arith.constant 0 : index
    %c0_4 = arith.constant 0 : index
    %4 = vector.load %arg4[%c0_3, %c0_4] : memref<1x128xf32, #tpu.memory_space<vmem>>, vector<1x128xf32>
    %5 = vector.broadcast %4 : vector<1x128xf32> to vector<512x128xf32>
    %6 = arith.addf %3, %5 : vector<512x128xf32>
    %cst_5 = arith.constant 0.000000e+00 : f32
    %7 = vector.broadcast %cst_5 : f32 to vector<512x128xf32>
    %8 = arith.maximumf %6, %7 : vector<512x128xf32>
    %c0_6 = arith.constant 0 : index
    %c0_7 = arith.constant 0 : index
    %9 = vector.load %arg5[%c0_6, %c0_7] : memref<512x1xf32, #tpu.memory_space<vmem>>, vector<512x1xf32>
    %10 = vector.broadcast %9 : vector<512x1xf32> to vector<512x128xf32>
    %11 = arith.mulf %8, %10 : vector<512x128xf32>
    %12 = arith.truncf %11 : vector<512x128xf32> to vector<512x128xbf16>
    %c0_8 = arith.constant 0 : index
    %c0_9 = arith.constant 0 : index
    %13 = vector.load %arg6[%c0_8, %c0_9] : memref<512x128xbf16, #tpu.memory_space<vmem>>, vector<512x128xbf16>
    tpu.vector_store %arg6[%c0_8, %c0_9], %12 {strides = array<i32>} : memref<512x128xbf16, #tpu.memory_space<vmem>>, vector<512x128xbf16>,
    return
  }
  func.func @transform_0(%arg0: i32, %arg1: i32) -> (i32, i32) {
    %c0_i32 = arith.constant 0 : i32
    %c0_i32_0 = arith.constant 0 : i32
    return %arg0, %c0_i32 : i32, i32
  }
  func.func @transform_1(%arg0: i32, %arg1: i32) -> (i32, i32) {
    %c0_i32 = arith.constant 0 : i32
    %c0_i32_0 = arith.constant 0 : i32
    return %c0_i32, %arg1 : i32, i32
  }
  func.func @transform_2(%arg0: i32, %arg1: i32) -> (i32, i32) {
    %c0_i32 = arith.constant 0 : i32
    %c0_i32_0 = arith.constant 0 : i32
    return %c0_i32, %arg1 : i32, i32
  }
  func.func @transform_3(%arg0: i32, %arg1: i32) -> (i32, i32) {
    %c0_i32 = arith.constant 0 : i32
    %c0_i32_0 = arith.constant 0 : i32
    return %arg0, %c0_i32 : i32, i32
  }
  func.func @transform_4(%arg0: i32, %arg1: i32) -> (i32, i32) {
    %c0_i32 = arith.constant 0 : i32
    return %arg0, %arg1 : i32, i32
  }
}

</mosaic_0001>

<llo_original>
// kernel: tpu_custom_call.1
$region0: #{tpu_custom_call.1}
  #allocation0 [shape = 'u32[]', space=smem, size = 0x4, offset = 0x4, fixed_abs, tag = 'smem constant byte address 0x4 - core index']
  #allocation1 [shape = 'u32[144,128]{1,0:T(1,128)}', space=vmem, size = 0x12000, scoped, tag = 'internal scratch']
  %s0 = inlined_call_operand.vmem [shape: f32[1536,8], index: 0, kind: input, shape index: {}]
  %s1 = inlined_call_operand.vmem [shape: bf16[8,128], index: 1, kind: input, shape index: {}]
  %s2 = inlined_call_operand.vmem [shape: f32[1,128], index: 2, kind: input, shape index: {}]
  %s3 = inlined_call_operand.vmem [shape: f32[1536,1], index: 3, kind: input, shape index: {}]
  %s4 = inlined_call_operand.hbm [shape: bf16[1536,128], index: 4, kind: output, shape index: {}]
  %s5 = sld [smem:[#allocation0]]
  $region49: #{tpu_custom_call.1} parent=0
    _
  %s7 = ssub.s32 1, %s5
  %s8 = scalar_select 0, %s7, %s5
  $region1: #{tpu_custom_call.1} parent=0
    #allocation2 [shape = 'u8[262144]{0}', space=vmem, size = 0x40000, scoped, tag = 'output window, operand 0']
    #allocation3 [shape = 's32[2]{0}', space=sflag, size = 0x8, scoped, tag = 'scoped memory for tpu_custom_call.1']
    %9 = vsyncpa [#allocation3], 0
    %s10 = scalar_lea.sflag [#allocation3], 1
    %11 = vsyncpa %s10, 0
    loop: start=0, step=1, limit=5
    $region2: #{tpu_custom_call.1} parent=1 // loop_pre_header
      _
    $region3: #{tpu_custom_call.1} parent=1 // loop_header
      %s13 = sphi 0, %s17
      %p14 = scmp.ge.s32.totalorder %s13, 5
      %s20 = sphi 0, %s32
      %s21 = sphi 0, %s28
      %s22 = sphi 0, %s20
      %s23 = sphi 0, %s21
      %s24 = sphi 0, %s22
      %s25 = sphi 0, %s23
      %s35 = sphi 0, %s37
      %s38 = sphi 0, %s35
      %s39 = sphi 0, %s38
      %s55 = sphi 0, %s39
      %s61 = sphi 0, %s63
      %s64 = sphi 0, %s61
      %s65 = sphi 0, %s64
      %s81 = sphi 0, %s65
      %s87 = sphi 0, %s89
      %s90 = sphi 0, %s87
      %s91 = sphi 0, %s90
      %s107 = sphi 0, %s91
      %s113 = sphi 0, %s115
      %s116 = sphi 0, %s113
      %s117 = sphi 0, %s116
      %s133 = sphi 0, %s117
      %s141 = sphi 0, %s143
      %s144 = sphi 0, %s141
      %s145 = sphi 0, %s144
      %s161 = sphi 0, %s145
    $region4: #{tpu_custom_call.1} parent=1 // loop_header_branch
      %16 = sbr.rel (%p14) target = $region8
    $region5: #{tpu_custom_call.1} parent=1 // loop_body
      %s18 = ssub.s32 %s13, 1
      %s19 = ssub.s32 %s13, 2
      %s26 = sadd.s32 1, %s21
      %p27 = scmp.ge.s32.totalorder %s26, 1
      %s28 = scalar_select %p27, 0, %s26
      %s29 = sadd.s32 1, %s20
      %s30 = scalar_select %p27, %s29, %s20
      %p31 = scmp.ge.s32.totalorder %s30, 3
      %s32 = scalar_select %p31, 0, %s30
      %s33 = ssub.s32 %s20, %s32
      %p34 = scmp.eq.s32.totalorder %s33, 0
      %s36 = sadd.s32 %s35, 1
      %s37 = scalar_select %p34, %s35, %s36
      %p40 = pneg %p34
      %p41 = scmp.eq.s32.totalorder %s13, 2
      %p42 = por %p40, %p41
      %p43 = scmp.ne.s32.totalorder %s35, %s38
      %p44 = scmp.eq.s32.totalorder %s13, 0
      %p45 = por %p43, %p44
      %p46 = scmp.ne.s32.totalorder %s35, %s38
      %p47 = scmp.eq.s32.totalorder %s18, 2
      %p48 = por %p46, %p47
      %p49 = scmp.ne.s32.totalorder %s38, %s39
      %p50 = scmp.eq.s32.totalorder %s18, 0
      %p51 = por %p49, %p50
      %p52 = scmp.ne.s32.totalorder %s38, %s39
      %p53 = scmp.eq.s32.totalorder %s19, 2
      %p54 = por %p52, %p53
      %p56 = scmp.ne.s32.totalorder %s39, %s55
      %p57 = scmp.eq.s32.totalorder %s19, 0
      %p58 = por %p56, %p57
      %s59 = ssub.s32 %s21, %s28
      %p60 = scmp.eq.s32.totalorder %s59, 0
      %s62 = sadd.s32 %s61, 1
      %s63 = scalar_select %p60, %s61, %s62
      %p66 = pneg %p60
      %p67 = scmp.eq.s32.totalorder %s13, 2
      %p68 = por %p66, %p67
      %p69 = scmp.ne.s32.totalorder %s61, %s64
      %p70 = scmp.eq.s32.totalorder %s13, 0
      %p71 = por %p69, %p70
      %p72 = scmp.ne.s32.totalorder %s61, %s64
      %p73 = scmp.eq.s32.totalorder %s18, 2
      %p74 = por %p72, %p73
      %p75 = scmp.ne.s32.totalorder %s64, %s65
      %p76 = scmp.eq.s32.totalorder %s18, 0
      %p77 = por %p75, %p76
      %p78 = scmp.ne.s32.totalorder %s64, %s65
      %p79 = scmp.eq.s32.totalorder %s19, 2
      %p80 = por %p78, %p79
      %p82 = scmp.ne.s32.totalorder %s65, %s81
      %p83 = scmp.eq.s32.totalorder %s19, 0
      %p84 = por %p82, %p83
      %s85 = ssub.s32 %s21, %s28
      %p86 = scmp.eq.s32.totalorder %s85, 0
      %s88 = sadd.s32 %s87, 1
      %s89 = scalar_select %p86, %s87, %s88
      %p92 = pneg %p86
      %p93 = scmp.eq.s32.totalorder %s13, 2
      %p94 = por %p92, %p93
      %p95 = scmp.ne.s32.totalorder %s87, %s90
      %p96 = scmp.eq.s32.totalorder %s13, 0
      %p97 = por %p95, %p96
      %p98 = scmp.ne.s32.totalorder %s87, %s90
      %p99 = scmp.eq.s32.totalorder %s18, 2
      %p100 = por %p98, %p99
      %p101 = scmp.ne.s32.totalorder %s90, %s91
      %p102 = scmp.eq.s32.totalorder %s18, 0
      %p103 = por %p101, %p102
      %p104 = scmp.ne.s32.totalorder %s90, %s91
      %p105 = scmp.eq.s32.totalorder %s19, 2
      %p106 = por %p104, %p105
      %p108 = scmp.ne.s32.totalorder %s91, %s107
      %p109 = scmp.eq.s32.totalorder %s19, 0
      %p110 = por %p108, %p109
      %s111 = ssub.s32 %s20, %s32
      %p112 = scmp.eq.s32.totalorder %s111, 0
      %s114 = sadd.s32 %s113, 1
      %s115 = scalar_select %p112, %s113, %s114
      %p118 = pneg %p112
      %p119 = scmp.eq.s32.totalorder %s13, 2
      %p120 = por %p118, %p119
      %p121 = scmp.ne.s32.totalorder %s113, %s116
      %p122 = scmp.eq.s32.totalorder %s13, 0
      %p123 = por %p121, %p122
      %p124 = scmp.ne.s32.totalorder %s113, %s116
      %p125 = scmp.eq.s32.totalorder %s18, 2
      %p126 = por %p124, %p125
      %p127 = scmp.ne.s32.totalorder %s116, %s117
      %p128 = scmp.eq.s32.totalorder %s18, 0
      %p129 = por %p127, %p128
      %p130 = scmp.ne.s32.totalorder %s116, %s117
      %p131 = scmp.eq.s32.totalorder %s19, 2
      %p132 = por %p130, %p131
      %p134 = scmp.ne.s32.totalorder %s117, %s133
      %p135 = scmp.eq.s32.totalorder %s19, 0
      %p136 = por %p134, %p135
      %s137 = ssub.s32 %s20, %s32
      %s138 = ssub.s32 %s21, %s28
      %s139 = sor.u32 %s137, %s138
      %p140 = scmp.eq.s32.totalorder %s139, 0
      %s142 = sadd.s32 %s141, 1
      %s143 = scalar_select %p140, %s141, %s142
      %p146 = pneg %p140
      %p147 = scmp.eq.s32.totalorder %s13, 2
      %p148 = por %p146, %p147
      %p149 = scmp.ne.s32.totalorder %s141, %s144
      %p150 = scmp.eq.s32.totalorder %s13, 0
      %p151 = por %p149, %p150
      %p152 = scmp.ne.s32.totalorder %s141, %s144
      %p153 = scmp.eq.s32.totalorder %s18, 2
      %p154 = por %p152, %p153
      %p155 = scmp.ne.s32.totalorder %s144, %s145
      %p156 = scmp.eq.s32.totalorder %s18, 0
      %p157 = por %p155, %p156
      %p158 = scmp.ne.s32.totalorder %s144, %s145
      %p159 = scmp.eq.s32.totalorder %s19, 2
      %p160 = por %p158, %p159
      %p162 = scmp.ne.s32.totalorder %s145, %s161
      %p163 = scmp.eq.s32.totalorder %s19, 0
      %p164 = por %p162, %p163
      %p165 = scmp.le.s32.totalorder 1, %s13
      %p166 = scmp.lt.s32.totalorder %s13, 4
      %p167 = pnand %p165, %p166
      %p168 = pneg %p167
      // Predicated region
      $region9: #{tpu_custom_call.1} parent=5 // pred_check
        _
      $region10: #{tpu_custom_call.1} parent=5 // pred_check_branch
        %170 = sbr.rel (%p167) target = $region12
      $region11: #{tpu_custom_call.1} parent=5 // pred_region
        %s171 = ssub.s32 %s13, 1
        // Predicated region
        $region13: #{tpu_custom_call.1} parent=11 // pred_check
          %p172 = pneg %p77
        $region14: #{tpu_custom_call.1} parent=11 // pred_check_branch
          %174 = sbr.rel (%p172) target = $region16
        $region15: #{tpu_custom_call.1} parent=11 // pred_region
          %p175 = scmp.lt.s32.totalorder %s23, 0
          %s176 = scalar_select %p175, %s23, 0
          %s177 = smul.addr %s176, 4
          %s178 = scalar_lea.vmem %s1, %s177
        $region16: #{tpu_custom_call.1} parent=11 // pred_fallthru
          _
        // Predicated region
        $region17: #{tpu_custom_call.1} parent=11 // pred_check
          %p179 = pneg %p103
        $region18: #{tpu_custom_call.1} parent=11 // pred_check_branch
          %181 = sbr.rel (%p179) target = $region20
        $region19: #{tpu_custom_call.1} parent=11 // pred_region
          %p182 = scmp.lt.s32.totalorder %s23, 0
          %s183 = scalar_select %p182, %s23, 0
          %s184 = scalar_lea.vmem %s2, %s183
        $region20: #{tpu_custom_call.1} parent=11 // pred_fallthru
          _
      $region12: #{tpu_custom_call.1} parent=5 // pred_fallthru
        _
      %p185 = scmp.lt.s32.totalorder %s13, 3
      // Predicated region
      $region21: #{tpu_custom_call.1} parent=5 // pred_check
        %p186 = pneg %p185
      $region22: #{tpu_custom_call.1} parent=5 // pred_check_branch
        %188 = sbr.rel (%p186) target = $region24
      $region23: #{tpu_custom_call.1} parent=5 // pred_region
        // Predicated region
        $region25: #{tpu_custom_call.1} parent=23 // pred_check
          %p189 = pneg %p45
        $region26: #{tpu_custom_call.1} parent=23 // pred_check_branch
          %191 = sbr.rel (%p189) target = $region28
        $region27: #{tpu_custom_call.1} parent=23 // pred_region
          %s192 = smul.u32 64, %s20
          %p193 = scmp.lt.s32.totalorder %s192, 191
          %s194 = scalar_select %p193, %s192, 191
          %s195 = smul.addr %s194, 8
          %s196 = scalar_lea.vmem %s0, %s195
          %s197 = smul.u32 64, %s20
        $region28: #{tpu_custom_call.1} parent=23 // pred_fallthru
          _
        // Predicated region
        $region29: #{tpu_custom_call.1} parent=23 // pred_check
          %p198 = pneg %p123
        $region30: #{tpu_custom_call.1} parent=23 // pred_check_branch
          %200 = sbr.rel (%p198) target = $region32
        $region31: #{tpu_custom_call.1} parent=23 // pred_region
          %s201 = smul.u32 64, %s20
          %p202 = scmp.lt.s32.totalorder %s201, 191
          %s203 = scalar_select %p202, %s201, 191
          %s204 = smul.addr %s203, 8
          %s205 = scalar_lea.vmem %s3, %s204
          %s206 = smul.u32 64, %s20
        $region32: #{tpu_custom_call.1} parent=23 // pred_fallthru
          _
      $region24: #{tpu_custom_call.1} parent=5 // pred_fallthru
        _
      %p207 = scmp.le.s32.totalorder 1, %s13
      %p208 = scmp.lt.s32.totalorder %s13, 4
      %p209 = pnand %p207, %p208
      %p210 = pneg %p209
      // Predicated region
      $region33: #{tpu_custom_call.1} parent=5 // pred_check
        _
      $region34: #{tpu_custom_call.1} parent=5 // pred_check_branch
        %212 = sbr.rel (%p209) target = $region36
      $region35: #{tpu_custom_call.1} parent=5 // pred_region
        %s213 = ssub.s32 %s13, 1
        %s214 = smul.u32 64, %s22
        %p215 = scmp.lt.s32.totalorder %s214, 191
        %s216 = scalar_select %p215, %s214, 191
        %s217 = smul.addr %s216, 8
        %s218 = scalar_lea.vmem %s0, %s217
        %p219 = pneg %p51
        %p220 = pneg %p48
        %p221 = scmp.lt.s32.totalorder %s23, 0
        %s222 = scalar_select %p221, %s23, 0
        %s223 = smul.addr %s222, 4
        %s224 = scalar_lea.vmem %s1, %s223
        %p225 = pneg %p77
        %p226 = pneg %p74
        %p227 = scmp.lt.s32.totalorder %s23, 0
        %s228 = scalar_select %p227, %s23, 0
        %s229 = scalar_lea.vmem %s2, %s228
        %p230 = pneg %p103
        %p231 = pneg %p100
        %s232 = smul.u32 64, %s22
        %p233 = scmp.lt.s32.totalorder %s232, 191
        %s234 = scalar_select %p233, %s232, 191
        %s235 = smul.addr %s234, 8
        %s236 = scalar_lea.vmem %s3, %s235
        %p237 = pneg %p129
        %p238 = pneg %p126
        %p239 = pneg %p157
        %p240 = pneg %p154
        %s241 = sand.u32 %s144, 1
        %s242 = scalar_lea.sflag [#allocation3], %s241
        %s243 = sand.u32 %s144, 1
        %s244 = smul.addr %s243, 256
        %s245 = scalar_lea.vmem [#allocation2], %s244
        %s246 = smul.u32 64, %s22
        %p247 = scmp.lt.s32.totalorder %s246, 191
        %s248 = scalar_select %p247, %s246, 191
        %s249 = smul.addr %s248, 8
        %s250 = scalar_lea.vmem %s0, %s249
        %s251 = smul.u32 64, %s22
        %p252 = scmp.lt.s32.totalorder %s23, 0
        %s253 = scalar_select %p252, %s23, 0
        %s254 = smul.addr %s253, 4
        %s255 = scalar_lea.vmem %s1, %s254
        %p256 = scmp.lt.s32.totalorder %s23, 0
        %s257 = scalar_select %p256, %s23, 0
        %s258 = scalar_lea.vmem %s2, %s257
        %s259 = smul.u32 64, %s22
        %p260 = scmp.lt.s32.totalorder %s259, 191
        %s261 = scalar_select %p260, %s259, 191
        %s262 = smul.addr %s261, 8
        %s263 = scalar_lea.vmem %s3, %s262
        %s264 = smul.u32 64, %s22
        %s265 = smul.u32 64, %s22
        %v267 = vld [vmem:[%s250] sm:$0xff]
        %v268 = vld [vmem:[%s250 + $0x8] sm:$0xff]
        %v269 = vld [vmem:[%s250 + $0x10] sm:$0xff]
        %v270 = vld [vmem:[%s250 + $0x18] sm:$0xff]
        %v271 = vld [vmem:[%s250 + $0x20] sm:$0xff]
        %v272 = vld [vmem:[%s250 + $0x28] sm:$0xff]
        %v273 = vld [vmem:[%s250 + $0x30] sm:$0xff]
        %v274 = vld [vmem:[%s250 + $0x38] sm:$0xff]
        %v275 = vld [vmem:[%s250 + $0x40] sm:$0xff]
        %v276 = vld [vmem:[%s250 + $0x48] sm:$0xff]
        %v277 = vld [vmem:[%s250 + $0x50] sm:$0xff]
        %v278 = vld [vmem:[%s250 + $0x58] sm:$0xff]
        %v279 = vld [vmem:[%s250 + $0x60] sm:$0xff]
        %v280 = vld [vmem:[%s250 + $0x68] sm:$0xff]
        %v281 = vld [vmem:[%s250 + $0x70] sm:$0xff]
        %v282 = vld [vmem:[%s250 + $0x78] sm:$0xff]
        %v283 = vld [vmem:[%s250 + $0x80] sm:$0xff]
        %v284 = vld [vmem:[%s250 + $0x88] sm:$0xff]
        %v285 = vld [vmem:[%s250 + $0x90] sm:$0xff]
        %v286 = vld [vmem:[%s250 + $0x98] sm:$0xff]
        %v287 = vld [vmem:[%s250 + $0xa0] sm:$0xff]
        %v288 = vld [vmem:[%s250 + $0xa8] sm:$0xff]
        %v289 = vld [vmem:[%s250 + $0xb0] sm:$0xff]
        %v290 = vld [vmem:[%s250 + $0xb8] sm:$0xff]
        %v291 = vld [vmem:[%s250 + $0xc0] sm:$0xff]
        %v292 = vld [vmem:[%s250 + $0xc8] sm:$0xff]
        %v293 = vld [vmem:[%s250 + $0xd0] sm:$0xff]
        %v294 = vld [vmem:[%s250 + $0xd8] sm:$0xff]
        %v295 = vld [vmem:[%s250 + $0xe0] sm:$0xff]
        %v296 = vld [vmem:[%s250 + $0xe8] sm:$0xff]
        %v297 = vld [vmem:[%s250 + $0xf0] sm:$0xff]
        %v298 = vld [vmem:[%s250 + $0xf8] sm:$0xff]
        %v299 = vld [vmem:[%s250 + $0x100] sm:$0xff]
        %v300 = vld [vmem:[%s250 + $0x108] sm:$0xff]
        %v301 = vld [vmem:[%s250 + $0x110] sm:$0xff]
        %v302 = vld [vmem:[%s250 + $0x118] sm:$0xff]
        %v303 = vld [vmem:[%s250 + $0x120] sm:$0xff]
        %v304 = vld [vmem:[%s250 + $0x128] sm:$0xff]
        %v305 = vld [vmem:[%s250 + $0x130] sm:$0xff]
        %v306 = vld [vmem:[%s250 + $0x138] sm:$0xff]
        %v307 = vld [vmem:[%s250 + $0x140] sm:$0xff]
        %v308 = vld [vmem:[%s250 + $0x148] sm:$0xff]
        %v309 = vld [vmem:[%s250 + $0x150] sm:$0xff]
        %v310 = vld [vmem:[%s250 + $0x158] sm:$0xff]
        %v311 = vld [vmem:[%s250 + $0x160] sm:$0xff]
        %v312 = vld [vmem:[%s250 + $0x168] sm:$0xff]
        %v313 = vld [vmem:[%s250 + $0x170] sm:$0xff]
        %v314 = vld [vmem:[%s250 + $0x178] sm:$0xff]
        %v315 = vld [vmem:[%s250 + $0x180] sm:$0xff]
        %v316 = vld [vmem:[%s250 + $0x188] sm:$0xff]
        %v317 = vld [vmem:[%s250 + $0x190] sm:$0xff]
        %v318 = vld [vmem:[%s250 + $0x198] sm:$0xff]
        %v319 = vld [vmem:[%s250 + $0x1a0] sm:$0xff]
        %v320 = vld [vmem:[%s250 + $0x1a8] sm:$0xff]
        %v321 = vld [vmem:[%s250 + $0x1b0] sm:$0xff]
        %v322 = vld [vmem:[%s250 + $0x1b8] sm:$0xff]
        %v323 = vld [vmem:[%s250 + $0x1c0] sm:$0xff]
        %v324 = vld [vmem:[%s250 + $0x1c8] sm:$0xff]
        %v325 = vld [vmem:[%s250 + $0x1d0] sm:$0xff]
        %v326 = vld [vmem:[%s250 + $0x1d8] sm:$0xff]
        %v327 = vld [vmem:[%s250 + $0x1e0] sm:$0xff]
        %v328 = vld [vmem:[%s250 + $0x1e8] sm:$0xff]
        %v329 = vld [vmem:[%s250 + $0x1f0] sm:$0xff]
        %v330 = vld [vmem:[%s250 + $0x1f8] sm:$0xff]
        %v331 = vpack.c.bf16 %v268, %v267
        %v332 = vpack.c.bf16 %v270, %v269
        %v333 = vpack.c.bf16 %v272, %v271
        %v334 = vpack.c.bf16 %v274, %v273
        %v335 = vpack.c.bf16 %v276, %v275
        %v336 = vpack.c.bf16 %v278, %v277
        %v337 = vpack.c.bf16 %v280, %v279
        %v338 = vpack.c.bf16 %v282, %v281
        %v339 = vpack.c.bf16 %v284, %v283
        %v340 = vpack.c.bf16 %v286, %v285
        %v341 = vpack.c.bf16 %v288, %v287
        %v342 = vpack.c.bf16 %v290, %v289
        %v343 = vpack.c.bf16 %v292, %v291
        %v344 = vpack.c.bf16 %v294, %v293
        %v345 = vpack.c.bf16 %v296, %v295
        %v346 = vpack.c.bf16 %v298, %v297
        %v347 = vpack.c.bf16 %v300, %v299
        %v348 = vpack.c.bf16 %v302, %v301
        %v349 = vpack.c.bf16 %v304, %v303
        %v350 = vpack.c.bf16 %v306, %v305
        %v351 = vpack.c.bf16 %v308, %v307
        %v352 = vpack.c.bf16 %v310, %v309
        %v353 = vpack.c.bf16 %v312, %v311
        %v354 = vpack.c.bf16 %v314, %v313
        %v355 = vpack.c.bf16 %v316, %v315
        %v356 = vpack.c.bf16 %v318, %v317
        %v357 = vpack.c.bf16 %v320, %v319
        %v358 = vpack.c.bf16 %v322, %v321
        %v359 = vpack.c.bf16 %v324, %v323
        %v360 = vpack.c.bf16 %v326, %v325
        %v361 = vpack.c.bf16 %v328, %v327
        %v362 = vpack.c.bf16 %v330, %v329
        %v363 = vld [vmem:[%s255] sm:$0xf]
        %v364 = vld [vmem:[%s258] sm:$0x1]
        %v366 = vlaneseq
        %v367 = vshrl.u32 %v366, 7
        %v368 = vsub.s32 0, %v367
        %v369 = vrot.slane %v364, %v368
        %vm371 = vcmask 64512
        %v373 = vsel %vm371, %v331, 0
        %v376 = vsel %vm371, %v332, 0
        %v379 = vsel %vm371, %v333, 0
        %v382 = vsel %vm371, %v334, 0
        %v385 = vsel %vm371, %v335, 0
        %v388 = vsel %vm371, %v336, 0
        %v391 = vsel %vm371, %v337, 0
        %v394 = vsel %vm371, %v338, 0
        %v397 = vsel %vm371, %v339, 0
        %v400 = vsel %vm371, %v340, 0
        %v403 = vsel %vm371, %v341, 0
        %v406 = vsel %vm371, %v342, 0
        %v409 = vsel %vm371, %v343, 0
        %v412 = vsel %vm371, %v344, 0
        %v415 = vsel %vm371, %v345, 0
        %v418 = vsel %vm371, %v346, 0
        %v421 = vsel %vm371, %v347, 0
        %v424 = vsel %vm371, %v348, 0
        %v427 = vsel %vm371, %v349, 0
        %v430 = vsel %vm371, %v350, 0
        %v433 = vsel %vm371, %v351, 0
        %v436 = vsel %vm371, %v352, 0
        %v439 = vsel %vm371, %v353, 0
        %v442 = vsel %vm371, %v354, 0
        %v445 = vsel %vm371, %v355, 0
        %v448 = vsel %vm371, %v356, 0
        %v451 = vsel %vm371, %v357, 0
        %v454 = vsel %vm371, %v358, 0
        %v457 = vsel %vm371, %v359, 0
        %v460 = vsel %vm371, %v360, 0
        %v463 = vsel %vm371, %v361, 0
        %v466 = vsel %vm371, %v362, 0
        %vm468 = vcmask 1043456
        %v470 = vsel %vm468, %v363, 0
        %472 = vmatprep.subr.bf16.mxu0 0
        %473 = vmatpush1.bf16.msra.mxu0 0
        %474 = vmatprep.subr.bf16.mxu0 0
        %475 = vmatpush1.bf16.msra.mxu0 0
        %476 = vmatprep.subr.bf16.mxu0 0
        %477 = vmatpush1.bf16.msra.mxu0 0
        %478 = vmatprep.subr.bf16.mxu0 0
        %479 = vmatpush1.bf16.msra.mxu0 0
        %480 = vmatprep.subr.bf16.mxu0 0
        %481 = vmatpush1.bf16.msra.mxu0 0
        %482 = vmatprep.subr.bf16.mxu0 0
        %483 = vmatpush1.bf16.msra.mxu0 0
        %484 = vmatprep.subr.bf16.mxu0 0
        %485 = vmatpush1.bf16.msra.mxu0 0
        %486 = vmatprep.subr.bf16.mxu0 0
        %487 = vmatpush1.bf16.msra.mxu0 %v470
        %488 = vmatprep.subr.bf16.mxu0 0
        %489 = vmatpush2.bf16.msra.mxu0 0
        %490 = vmatprep.subr.bf16.mxu0 0
        %491 = vmatpush2.bf16.msra.mxu0 0
        %492 = vmatprep.subr.bf16.mxu0 0
        %493 = vmatpush2.bf16.msra.mxu0 0
        %494 = vmatprep.subr.bf16.mxu0 0
        %495 = vmatpush2.bf16.msra.mxu0 0
        %496 = vmatprep.subr.bf16.mxu0 0
        %497 = vmatpush2.bf16.msra.mxu0 0
        %498 = vmatprep.subr.bf16.mxu0 0
        %499 = vmatpush2.bf16.msra.mxu0 0
        %500 = vmatprep.subr.bf16.mxu0 0
        %501 = vmatpush2.bf16.msra.mxu0 0
        %502 = vmatprep.subr.bf16.mxu0 0
        %503 = vmatpush2.bf16.msra.mxu0 0
        %504 = vmatprep.mubr.bf16.mxu0 0
        %505 = vmatmul.mubr.bf16.gmra.mxu0 %v373
        %v506 = vpop.f32.mrf.mxu0
        %v507 = vadd.f32 %v369, %v506
        %v508 = vpop.f32.mrf.mxu0
        %v509 = vpop.f32.mrf.mxu0
        %v510 = vadd.f32 %v369, %v509
        %v511 = vpop.f32.mrf.mxu0
        %512 = vmatprep.mubr.bf16.mxu0 0
        %513 = vmatmul.mubr.bf16.gmra.mxu0 %v376
        %v514 = vpop.f32.mrf.mxu0
        %v515 = vadd.f32 %v369, %v514
        %v516 = vpop.f32.mrf.mxu0
        %v517 = vpop.f32.mrf.mxu0
        %v518 = vadd.f32 %v369, %v517
        %v519 = vpop.f32.mrf.mxu0
        %520 = vmatprep.mubr.bf16.mxu0 0
        %521 = vmatmul.mubr.bf16.gmra.mxu0 %v379
        %v522 = vpop.f32.mrf.mxu0
        %v523 = vadd.f32 %v369, %v522
        %v524 = vpop.f32.mrf.mxu0
        %v525 = vpop.f32.mrf.mxu0
        %v526 = vadd.f32 %v369, %v525
        %v527 = vpop.f32.mrf.mxu0
        %528 = vmatprep.mubr.bf16.mxu0 0
        %529 = vmatmul.mubr.bf16.gmra.mxu0 %v382
        %v530 = vpop.f32.mrf.mxu0
        %v531 = vadd.f32 %v369, %v530
        %v532 = vpop.f32.mrf.mxu0
        %v533 = vpop.f32.mrf.mxu0
        %v534 = vadd.f32 %v369, %v533
        %v535 = vpop.f32.mrf.mxu0
        %536 = vmatprep.mubr.bf16.mxu0 0
        %537 = vmatmul.mubr.bf16.gmra.mxu0 %v385
        %v538 = vpop.f32.mrf.mxu0
        %v539 = vadd.f32 %v369, %v538
        %v540 = vpop.f32.mrf.mxu0
        %v541 = vpop.f32.mrf.mxu0
        %v542 = vadd.f32 %v369, %v541
        %v543 = vpop.f32.mrf.mxu0
        %544 = vmatprep.mubr.bf16.mxu0 0
        %545 = vmatmul.mubr.bf16.gmra.mxu0 %v388
        %v546 = vpop.f32.mrf.mxu0
        %v547 = vadd.f32 %v369, %v546
        %v548 = vpop.f32.mrf.mxu0
        %v549 = vpop.f32.mrf.mxu0
        %v550 = vadd.f32 %v369, %v549
        %v551 = vpop.f32.mrf.mxu0
        %552 = vmatprep.mubr.bf16.mxu0 0
        %553 = vmatmul.mubr.bf16.gmra.mxu0 %v391
        %v554 = vpop.f32.mrf.mxu0
        %v555 = vadd.f32 %v369, %v554
        %v556 = vpop.f32.mrf.mxu0
        %v557 = vpop.f32.mrf.mxu0
        %v558 = vadd.f32 %v369, %v557
        %v559 = vpop.f32.mrf.mxu0
        %560 = vmatprep.mubr.bf16.mxu0 0
        %561 = vmatmul.mubr.bf16.gmra.mxu0 %v394
        %v562 = vpop.f32.mrf.mxu0
        %v563 = vadd.f32 %v369, %v562
        %v564 = vpop.f32.mrf.mxu0
        %v565 = vpop.f32.mrf.mxu0
        %v566 = vadd.f32 %v369, %v565
        %v567 = vpop.f32.mrf.mxu0
        %568 = vmatprep.mubr.bf16.mxu0 0
        %569 = vmatmul.mubr.bf16.gmra.mxu0 %v397
        %v570 = vpop.f32.mrf.mxu0
        %v571 = vadd.f32 %v369, %v570
        %v572 = vpop.f32.mrf.mxu0
        %v573 = vpop.f32.mrf.mxu0
        %v574 = vadd.f32 %v369, %v573
        %v575 = vpop.f32.mrf.mxu0
        %576 = vmatprep.mubr.bf16.mxu0 0
        %577 = vmatmul.mubr.bf16.gmra.mxu0 %v400
        %v578 = vpop.f32.mrf.mxu0
        %v579 = vadd.f32 %v369, %v578
        %v580 = vpop.f32.mrf.mxu0
        %v581 = vpop.f32.mrf.mxu0
        %v582 = vadd.f32 %v369, %v581
        %v583 = vpop.f32.mrf.mxu0
        %584 = vmatprep.mubr.bf16.mxu0 0
        %585 = vmatmul.mubr.bf16.gmra.mxu0 %v403
        %v586 = vpop.f32.mrf.mxu0
        %v587 = vadd.f32 %v369, %v586
        %v588 = vpop.f32.mrf.mxu0
        %v589 = vpop.f32.mrf.mxu0
        %v590 = vadd.f32 %v369, %v589
        %v591 = vpop.f32.mrf.mxu0
        %592 = vmatprep.mubr.bf16.mxu0 0
        %593 = vmatmul.mubr.bf16.gmra.mxu0 %v406
        %v594 = vpop.f32.mrf.mxu0
        %v595 = vadd.f32 %v369, %v594
        %v596 = vpop.f32.mrf.mxu0
        %v597 = vpop.f32.mrf.mxu0
        %v598 = vadd.f32 %v369, %v597
        %v599 = vpop.f32.mrf.mxu0
        %600 = vmatprep.mubr.bf16.mxu0 0
        %601 = vmatmul.mubr.bf16.gmra.mxu0 %v409
        %v602 = vpop.f32.mrf.mxu0
        %v603 = vadd.f32 %v369, %v602
        %v604 = vpop.f32.mrf.mxu0
        %v605 = vpop.f32.mrf.mxu0
        %v606 = vadd.f32 %v369, %v605
        %v607 = vpop.f32.mrf.mxu0
        %608 = vmatprep.mubr.bf16.mxu0 0
        %609 = vmatmul.mubr.bf16.gmra.mxu0 %v412
        %v610 = vpop.f32.mrf.mxu0
        %v611 = vadd.f32 %v369, %v610
        %v612 = vpop.f32.mrf.mxu0
        %v613 = vpop.f32.mrf.mxu0
        %v614 = vadd.f32 %v369, %v613
        %v615 = vpop.f32.mrf.mxu0
        %616 = vmatprep.mubr.bf16.mxu0 0
        %617 = vmatmul.mubr.bf16.gmra.mxu0 %v415
        %v618 = vpop.f32.mrf.mxu0
        %v619 = vadd.f32 %v369, %v618
        %v620 = vpop.f32.mrf.mxu0
        %v621 = vpop.f32.mrf.mxu0
        %v622 = vadd.f32 %v369, %v621
        %v623 = vpop.f32.mrf.mxu0
        %624 = vmatprep.mubr.bf16.mxu0 0
        %625 = vmatmul.mubr.bf16.gmra.mxu0 %v418
        %v626 = vpop.f32.mrf.mxu0
        %v627 = vadd.f32 %v369, %v626
        %v628 = vpop.f32.mrf.mxu0
        %v629 = vpop.f32.mrf.mxu0
        %v630 = vadd.f32 %v369, %v629
        %v631 = vpop.f32.mrf.mxu0
        %632 = vmatprep.mubr.bf16.mxu0 0
        %633 = vmatmul.mubr.bf16.gmra.mxu0 %v421
        %v634 = vpop.f32.mrf.mxu0
        %v635 = vadd.f32 %v369, %v634
        %v636 = vpop.f32.mrf.mxu0
        %v637 = vpop.f32.mrf.mxu0
        %v638 = vadd.f32 %v369, %v637
        %v639 = vpop.f32.mrf.mxu0
        %640 = vmatprep.mubr.bf16.mxu0 0
        %641 = vmatmul.mubr.bf16.gmra.mxu0 %v424
        %v642 = vpop.f32.mrf.mxu0
        %v643 = vadd.f32 %v369, %v642
        %v644 = vpop.f32.mrf.mxu0
        %v645 = vpop.f32.mrf.mxu0
        %v646 = vadd.f32 %v369, %v645
        %v647 = vpop.f32.mrf.mxu0
        %648 = vmatprep.mubr.bf16.mxu0 0
        %649 = vmatmul.mubr.bf16.gmra.mxu0 %v427
        %v650 = vpop.f32.mrf.mxu0
        %v651 = vadd.f32 %v369, %v650
        %v652 = vpop.f32.mrf.mxu0
        %v653 = vpop.f32.mrf.mxu0
        %v654 = vadd.f32 %v369, %v653
        %v655 = vpop.f32.mrf.mxu0
        %656 = vmatprep.mubr.bf16.mxu0 0
        %657 = vmatmul.mubr.bf16.gmra.mxu0 %v430
        %v658 = vpop.f32.mrf.mxu0
        %v659 = vadd.f32 %v369, %v658
        %v660 = vpop.f32.mrf.mxu0
        %v661 = vpop.f32.mrf.mxu0
        %v662 = vadd.f32 %v369, %v661
        %v663 = vpop.f32.mrf.mxu0
        %664 = vmatprep.mubr.bf16.mxu0 0
        %665 = vmatmul.mubr.bf16.gmra.mxu0 %v433
        %v666 = vpop.f32.mrf.mxu0
        %v667 = vadd.f32 %v369, %v666
        %v668 = vpop.f32.mrf.mxu0
        %v669 = vpop.f32.mrf.mxu0
        %v670 = vadd.f32 %v369, %v669
        %v671 = vpop.f32.mrf.mxu0
        %672 = vmatprep.mubr.bf16.mxu0 0
        %673 = vmatmul.mubr.bf16.gmra.mxu0 %v436
        %v674 = vpop.f32.mrf.mxu0
        %v675 = vadd.f32 %v369, %v674
        %v676 = vpop.f32.mrf.mxu0
        %v677 = vpop.f32.mrf.mxu0
        %v678 = vadd.f32 %v369, %v677
        %v679 = vpop.f32.mrf.mxu0
        %680 = vmatprep.mubr.bf16.mxu0 0
        %681 = vmatmul.mubr.bf16.gmra.mxu0 %v439
        %v682 = vpop.f32.mrf.mxu0
        %v683 = vadd.f32 %v369, %v682
        %v684 = vpop.f32.mrf.mxu0
        %v685 = vpop.f32.mrf.mxu0
        %v686 = vadd.f32 %v369, %v685
        %v687 = vpop.f32.mrf.mxu0
        %688 = vmatprep.mubr.bf16.mxu0 0
        %689 = vmatmul.mubr.bf16.gmra.mxu0 %v442
        %v690 = vpop.f32.mrf.mxu0
        %v691 = vadd.f32 %v369, %v690
        %v692 = vpop.f32.mrf.mxu0
        %v693 = vpop.f32.mrf.mxu0
        %v694 = vadd.f32 %v369, %v693
        %v695 = vpop.f32.mrf.mxu0
        %696 = vmatprep.mubr.bf16.mxu0 0
        %697 = vmatmul.mubr.bf16.gmra.mxu0 %v445
        %v698 = vpop.f32.mrf.mxu0
        %v699 = vadd.f32 %v369, %v698
        %v700 = vpop.f32.mrf.mxu0
        %v701 = vpop.f32.mrf.mxu0
        %v702 = vadd.f32 %v369, %v701
        %v703 = vpop.f32.mrf.mxu0
        %704 = vmatprep.mubr.bf16.mxu0 0
        %705 = vmatmul.mubr.bf16.gmra.mxu0 %v448
        %v706 = vpop.f32.mrf.mxu0
        %v707 = vadd.f32 %v369, %v706
        %v708 = vpop.f32.mrf.mxu0
        %v709 = vpop.f32.mrf.mxu0
        %v710 = vadd.f32 %v369, %v709
        %v711 = vpop.f32.mrf.mxu0
        %712 = vmatprep.mubr.bf16.mxu0 0
        %713 = vmatmul.mubr.bf16.gmra.mxu0 %v451
        %v714 = vpop.f32.mrf.mxu0
        %v715 = vadd.f32 %v369, %v714
        %v716 = vpop.f32.mrf.mxu0
        %v717 = vpop.f32.mrf.mxu0
        %v718 = vadd.f32 %v369, %v717
        %v719 = vpop.f32.mrf.mxu0
        %720 = vmatprep.mubr.bf16.mxu0 0
        %721 = vmatmul.mubr.bf16.gmra.mxu0 %v454
        %v722 = vpop.f32.mrf.mxu0
        %v723 = vadd.f32 %v369, %v722
        %v724 = vpop.f32.mrf.mxu0
        %v725 = vpop.f32.mrf.mxu0
        %v726 = vadd.f32 %v369, %v725
        %v727 = vpop.f32.mrf.mxu0
        %728 = vmatprep.mubr.bf16.mxu0 0
        %729 = vmatmul.mubr.bf16.gmra.mxu0 %v457
        %v730 = vpop.f32.mrf.mxu0
        %v731 = vadd.f32 %v369, %v730
        %v732 = vpop.f32.mrf.mxu0
        %v733 = vpop.f32.mrf.mxu0
        %v734 = vadd.f32 %v369, %v733
        %v735 = vpop.f32.mrf.mxu0
        %736 = vmatprep.mubr.bf16.mxu0 0
        %737 = vmatmul.mubr.bf16.gmra.mxu0 %v460
        %v738 = vpop.f32.mrf.mxu0
        %v739 = vadd.f32 %v369, %v738
        %v740 = vpop.f32.mrf.mxu0
        %v741 = vpop.f32.mrf.mxu0
        %v742 = vadd.f32 %v369, %v741
        %v743 = vpop.f32.mrf.mxu0
        %744 = vmatprep.mubr.bf16.mxu0 0
        %745 = vmatmul.mubr.bf16.gmra.mxu0 %v463
        %v746 = vpop.f32.mrf.mxu0
        %v747 = vadd.f32 %v369, %v746
        %v748 = vpop.f32.mrf.mxu0
        %v749 = vpop.f32.mrf.mxu0
        %v750 = vadd.f32 %v369, %v749
        %v751 = vpop.f32.mrf.mxu0
        %752 = vmatprep.mubr.bf16.mxu0 0
        %753 = vmatmul.mubr.bf16.gmra.mxu0 %v466
        %v754 = vpop.f32.mrf.mxu0
        %v755 = vadd.f32 %v369, %v754
        %v756 = vpop.f32.mrf.mxu0
        %v757 = vpop.f32.mrf.mxu0
        %v758 = vadd.f32 %v369, %v757
        %v759 = vpop.f32.mrf.mxu0
        %760 = vdwg.mxu0
        %v761 = vmax.f32 %v507, 0.0
        %v762 = vmax.f32 %v510, 0.0
        %v763 = vmax.f32 %v515, 0.0
        %v764 = vmax.f32 %v518, 0.0
        %v765 = vmax.f32 %v523, 0.0
        %v766 = vmax.f32 %v526, 0.0
        %v767 = vmax.f32 %v531, 0.0
        %v768 = vmax.f32 %v534, 0.0
        %v769 = vmax.f32 %v539, 0.0
        %v770 = vmax.f32 %v542, 0.0
        %v771 = vmax.f32 %v547, 0.0
        %v772 = vmax.f32 %v550, 0.0
        %v773 = vmax.f32 %v555, 0.0
        %v774 = vmax.f32 %v558, 0.0
        %v775 = vmax.f32 %v563, 0.0
        %v776 = vmax.f32 %v566, 0.0
        %v777 = vmax.f32 %v571, 0.0
        %v778 = vmax.f32 %v574, 0.0
        %v779 = vmax.f32 %v579, 0.0
        %v780 = vmax.f32 %v582, 0.0
        %v781 = vmax.f32 %v587, 0.0
        %v782 = vmax.f32 %v590, 0.0
        %v783 = vmax.f32 %v595, 0.0
        %v784 = vmax.f32 %v598, 0.0
        %v785 = vmax.f32 %v603, 0.0
        %v786 = vmax.f32 %v606, 0.0
        %v787 = vmax.f32 %v611, 0.0
        %v788 = vmax.f32 %v614, 0.0
        %v789 = vmax.f32 %v619, 0.0
        %v790 = vmax.f32 %v622, 0.0
        %v791 = vmax.f32 %v627, 0.0
        %v792 = vmax.f32 %v630, 0.0
        %v793 = vmax.f32 %v635, 0.0
        %v794 = vmax.f32 %v638, 0.0
        %v795 = vmax.f32 %v643, 0.0
        %v796 = vmax.f32 %v646, 0.0
        %v797 = vmax.f32 %v651, 0.0
        %v798 = vmax.f32 %v654, 0.0
        %v799 = vmax.f32 %v659, 0.0
        %v800 = vmax.f32 %v662, 0.0
        %v801 = vmax.f32 %v667, 0.0
        %v802 = vmax.f32 %v670, 0.0
        %v803 = vmax.f32 %v675, 0.0
        %v804 = vmax.f32 %v678, 0.0
        %v805 = vmax.f32 %v683, 0.0
        %v806 = vmax.f32 %v686, 0.0
        %v807 = vmax.f32 %v691, 0.0
        %v808 = vmax.f32 %v694, 0.0
        %v809 = vmax.f32 %v699, 0.0
        %v810 = vmax.f32 %v702, 0.0
        %v811 = vmax.f32 %v707, 0.0
        %v812 = vmax.f32 %v710, 0.0
        %v813 = vmax.f32 %v715, 0.0
        %v814 = vmax.f32 %v718, 0.0
        %v815 = vmax.f32 %v723, 0.0
        %v816 = vmax.f32 %v726, 0.0
        %v817 = vmax.f32 %v731, 0.0
        %v818 = vmax.f32 %v734, 0.0
        %v819 = vmax.f32 %v739, 0.0
        %v820 = vmax.f32 %v742, 0.0
        %v821 = vmax.f32 %v747, 0.0
        %v822 = vmax.f32 %v750, 0.0
        %v823 = vmax.f32 %v755, 0.0
        %v824 = vmax.f32 %v758, 0.0
        %v825 = vld [vmem:[%s263] sm:$0xff]
        %v826 = vld [vmem:[%s263 + $0x8] sm:$0xff]
        %v827 = vld [vmem:[%s263 + $0x10] sm:$0xff]
        %v828 = vld [vmem:[%s263 + $0x18] sm:$0xff]
        %v829 = vld [vmem:[%s263 + $0x20] sm:$0xff]
        %v830 = vld [vmem:[%s263 + $0x28] sm:$0xff]
        %v831 = vld [vmem:[%s263 + $0x30] sm:$0xff]
        %v832 = vld [vmem:[%s263 + $0x38] sm:$0xff]
        %v833 = vld [vmem:[%s263 + $0x40] sm:$0xff]
        %v834 = vld [vmem:[%s263 + $0x48] sm:$0xff]
        %v835 = vld [vmem:[%s263 + $0x50] sm:$0xff]
        %v836 = vld [vmem:[%s263 + $0x58] sm:$0xff]
        %v837 = vld [vmem:[%s263 + $0x60] sm:$0xff]
        %v838 = vld [vmem:[%s263 + $0x68] sm:$0xff]
        %v839 = vld [vmem:[%s263 + $0x70] sm:$0xff]
        %v840 = vld [vmem:[%s263 + $0x78] sm:$0xff]
        %v841 = vld [vmem:[%s263 + $0x80] sm:$0xff]
        %v842 = vld [vmem:[%s263 + $0x88] sm:$0xff]
        %v843 = vld [vmem:[%s263 + $0x90] sm:$0xff]
        %v844 = vld [vmem:[%s263 + $0x98] sm:$0xff]
        %v845 = vld [vmem:[%s263 + $0xa0] sm:$0xff]
        %v846 = vld [vmem:[%s263 + $0xa8] sm:$0xff]
        %v847 = vld [vmem:[%s263 + $0xb0] sm:$0xff]
        %v848 = vld [vmem:[%s263 + $0xb8] sm:$0xff]
        %v849 = vld [vmem:[%s263 + $0xc0] sm:$0xff]
        %v850 = vld [vmem:[%s263 + $0xc8] sm:$0xff]
        %v851 = vld [vmem:[%s263 + $0xd0] sm:$0xff]
        %v852 = vld [vmem:[%s263 + $0xd8] sm:$0xff]
        %v853 = vld [vmem:[%s263 + $0xe0] sm:$0xff]
        %v854 = vld [vmem:[%s263 + $0xe8] sm:$0xff]
        %v855 = vld [vmem:[%s263 + $0xf0] sm:$0xff]
        %v856 = vld [vmem:[%s263 + $0xf8] sm:$0xff]
        %v857 = vld [vmem:[%s263 + $0x100] sm:$0xff]
        %v858 = vld [vmem:[%s263 + $0x108] sm:$0xff]
        %v859 = vld [vmem:[%s263 + $0x110] sm:$0xff]
        %v860 = vld [vmem:[%s263 + $0x118] sm:$0xff]
        %v861 = vld [vmem:[%s263 + $0x120] sm:$0xff]
        %v862 = vld [vmem:[%s263 + $0x128] sm:$0xff]
        %v863 = vld [vmem:[%s263 + $0x130] sm:$0xff]
        %v864 = vld [vmem:[%s263 + $0x138] sm:$0xff]
        %v865 = vld [vmem:[%s263 + $0x140] sm:$0xff]
        %v866 = vld [vmem:[%s263 + $0x148] sm:$0xff]
        %v867 = vld [vmem:[%s263 + $0x150] sm:$0xff]
        %v868 = vld [vmem:[%s263 + $0x158] sm:$0xff]
        %v869 = vld [vmem:[%s263 + $0x160] sm:$0xff]
        %v870 = vld [vmem:[%s263 + $0x168] sm:$0xff]
        %v871 = vld [vmem:[%s263 + $0x170] sm:$0xff]
        %v872 = vld [vmem:[%s263 + $0x178] sm:$0xff]
        %v873 = vld [vmem:[%s263 + $0x180] sm:$0xff]
        %v874 = vld [vmem:[%s263 + $0x188] sm:$0xff]
        %v875 = vld [vmem:[%s263 + $0x190] sm:$0xff]
        %v876 = vld [vmem:[%s263 + $0x198] sm:$0xff]
        %v877 = vld [vmem:[%s263 + $0x1a0] sm:$0xff]
        %v878 = vld [vmem:[%s263 + $0x1a8] sm:$0xff]
        %v879 = vld [vmem:[%s263 + $0x1b0] sm:$0xff]
        %v880 = vld [vmem:[%s263 + $0x1b8] sm:$0xff]
        %v881 = vld [vmem:[%s263 + $0x1c0] sm:$0xff]
        %v882 = vld [vmem:[%s263 + $0x1c8] sm:$0xff]
        %v883 = vld [vmem:[%s263 + $0x1d0] sm:$0xff]
        %v884 = vld [vmem:[%s263 + $0x1d8] sm:$0xff]
        %v885 = vld [vmem:[%s263 + $0x1e0] sm:$0xff]
        %v886 = vld [vmem:[%s263 + $0x1e8] sm:$0xff]
        %v887 = vld [vmem:[%s263 + $0x1f0] sm:$0xff]
        %v888 = vld [vmem:[%s263 + $0x1f8] sm:$0xff]
        %890 = vset.pattern.permute.xlu0 0
        %891 = vperm.xlu0 %890, %v825
        %v892 = vpop.permute.xlu0 %891
        %895 = vset.pattern.permute.xlu0 0
        %896 = vperm.xlu0 %895, %v826
        %v897 = vpop.permute.xlu0 %896
        %900 = vset.pattern.permute.xlu0 0
        %901 = vperm.xlu0 %900, %v827
        %v902 = vpop.permute.xlu0 %901
        %905 = vset.pattern.permute.xlu0 0
        %906 = vperm.xlu0 %905, %v828
        %v907 = vpop.permute.xlu0 %906
        %910 = vset.pattern.permute.xlu0 0
        %911 = vperm.xlu0 %910, %v829
        %v912 = vpop.permute.xlu0 %911
        %915 = vset.pattern.permute.xlu0 0
        %916 = vperm.xlu0 %915, %v830
        %v917 = vpop.permute.xlu0 %916
        %920 = vset.pattern.permute.xlu0 0
        %921 = vperm.xlu0 %920, %v831
        %v922 = vpop.permute.xlu0 %921
        %925 = vset.pattern.permute.xlu0 0
        %926 = vperm.xlu0 %925, %v832
        %v927 = vpop.permute.xlu0 %926
        %930 = vset.pattern.permute.xlu0 0
        %931 = vperm.xlu0 %930, %v833
        %v932 = vpop.permute.xlu0 %931
        %935 = vset.pattern.permute.xlu0 0
        %936 = vperm.xlu0 %935, %v834
        %v937 = vpop.permute.xlu0 %936
        %940 = vset.pattern.permute.xlu0 0
        %941 = vperm.xlu0 %940, %v835
        %v942 = vpop.permute.xlu0 %941
        %945 = vset.pattern.permute.xlu0 0
        %946 = vperm.xlu0 %945, %v836
        %v947 = vpop.permute.xlu0 %946
        %950 = vset.pattern.permute.xlu0 0
        %951 = vperm.xlu0 %950, %v837
        %v952 = vpop.permute.xlu0 %951
        %955 = vset.pattern.permute.xlu0 0
        %956 = vperm.xlu0 %955, %v838
        %v957 = vpop.permute.xlu0 %956
        %960 = vset.pattern.permute.xlu0 0
        %961 = vperm.xlu0 %960, %v839
        %v962 = vpop.permute.xlu0 %961
        %965 = vset.pattern.permute.xlu0 0
        %966 = vperm.xlu0 %965, %v840
        %v967 = vpop.permute.xlu0 %966
        %970 = vset.pattern.permute.xlu0 0
        %971 = vperm.xlu0 %970, %v841
        %v972 = vpop.permute.xlu0 %971
        %975 = vset.pattern.permute.xlu0 0
        %976 = vperm.xlu0 %975, %v842
        %v977 = vpop.permute.xlu0 %976
        %980 = vset.pattern.permute.xlu0 0
        %981 = vperm.xlu0 %980, %v843
        %v982 = vpop.permute.xlu0 %981
        %985 = vset.pattern.permute.xlu0 0
        %986 = vperm.xlu0 %985, %v844
        %v987 = vpop.permute.xlu0 %986
        %990 = vset.pattern.permute.xlu0 0
        %991 = vperm.xlu0 %990, %v845
        %v992 = vpop.permute.xlu0 %991
        %995 = vset.pattern.permute.xlu0 0
        %996 = vperm.xlu0 %995, %v846
        %v997 = vpop.permute.xlu0 %996
        %1000 = vset.pattern.permute.xlu0 0
        %1001 = vperm.xlu0 %1000, %v847
        %v1002 = vpop.permute.xlu0 %1001
        %1005 = vset.pattern.permute.xlu0 0
        %1006 = vperm.xlu0 %1005, %v848
        %v1007 = vpop.permute.xlu0 %1006
        %1010 = vset.pattern.permute.xlu0 0
        %1011 = vperm.xlu0 %1010, %v849
        %v1012 = vpop.permute.xlu0 %1011
        %1015 = vset.pattern.permute.xlu0 0
        %1016 = vperm.xlu0 %1015, %v850
        %v1017 = vpop.permute.xlu0 %1016
        %1020 = vset.pattern.permute.xlu0 0
        %1021 = vperm.xlu0 %1020, %v851
        %v1022 = vpop.permute.xlu0 %1021
        %1025 = vset.pattern.permute.xlu0 0
        %1026 = vperm.xlu0 %1025, %v852
        %v1027 = vpop.permute.xlu0 %1026
        %1030 = vset.pattern.permute.xlu0 0
        %1031 = vperm.xlu0 %1030, %v853
        %v1032 = vpop.permute.xlu0 %1031
        %1035 = vset.pattern.permute.xlu0 0
        %1036 = vperm.xlu0 %1035, %v854
        %v1037 = vpop.permute.xlu0 %1036
        %1040 = vset.pattern.permute.xlu0 0
        %1041 = vperm.xlu0 %1040, %v855
        %v1042 = vpop.permute.xlu0 %1041
        %1045 = vset.pattern.permute.xlu0 0
        %1046 = vperm.xlu0 %1045, %v856
        %v1047 = vpop.permute.xlu0 %1046
        %1050 = vset.pattern.permute.xlu0 0
        %1051 = vperm.xlu0 %1050, %v857
        %v1052 = vpop.permute.xlu0 %1051
        %1055 = vset.pattern.permute.xlu0 0
        %1056 = vperm.xlu0 %1055, %v858
        %v1057 = vpop.permute.xlu0 %1056
        %1060 = vset.pattern.permute.xlu0 0
        %1061 = vperm.xlu0 %1060, %v859
        %v1062 = vpop.permute.xlu0 %1061
        %1065 = vset.pattern.permute.xlu0 0
        %1066 = vperm.xlu0 %1065, %v860
        %v1067 = vpop.permute.xlu0 %1066
        %1070 = vset.pattern.permute.xlu0 0
        %1071 = vperm.xlu0 %1070, %v861
        %v1072 = vpop.permute.xlu0 %1071
        %1075 = vset.pattern.permute.xlu0 0
        %1076 = vperm.xlu0 %1075, %v862
        %v1077 = vpop.permute.xlu0 %1076
        %1080 = vset.pattern.permute.xlu0 0
        %1081 = vperm.xlu0 %1080, %v863
        %v1082 = vpop.permute.xlu0 %1081
        %1085 = vset.pattern.permute.xlu0 0
        %1086 = vperm.xlu0 %1085, %v864
        %v1087 = vpop.permute.xlu0 %1086
        %1090 = vset.pattern.permute.xlu0 0
        %1091 = vperm.xlu0 %1090, %v865
        %v1092 = vpop.permute.xlu0 %1091
        %1095 = vset.pattern.permute.xlu0 0
        %1096 = vperm.xlu0 %1095, %v866
        %v1097 = vpop.permute.xlu0 %1096
        %1100 = vset.pattern.permute.xlu0 0
        %1101 = vperm.xlu0 %1100, %v867
        %v1102 = vpop.permute.xlu0 %1101
        %1105 = vset.pattern.permute.xlu0 0
        %1106 = vperm.xlu0 %1105, %v868
        %v1107 = vpop.permute.xlu0 %1106
        %1110 = vset.pattern.permute.xlu0 0
        %1111 = vperm.xlu0 %1110, %v869
        %v1112 = vpop.permute.xlu0 %1111
        %1115 = vset.pattern.permute.xlu0 0
        %1116 = vperm.xlu0 %1115, %v870
        %v1117 = vpop.permute.xlu0 %1116
        %1120 = vset.pattern.permute.xlu0 0
        %1121 = vperm.xlu0 %1120, %v871
        %v1122 = vpop.permute.xlu0 %1121
        %1125 = vset.pattern.permute.xlu0 0
        %1126 = vperm.xlu0 %1125, %v872
        %v1127 = vpop.permute.xlu0 %1126
        %1130 = vset.pattern.permute.xlu0 0
        %1131 = vperm.xlu0 %1130, %v873
        %v1132 = vpop.permute.xlu0 %1131
        %1135 = vset.pattern.permute.xlu0 0
        %1136 = vperm.xlu0 %1135, %v874
        %v1137 = vpop.permute.xlu0 %1136
        %1140 = vset.pattern.permute.xlu0 0
        %1141 = vperm.xlu0 %1140, %v875
        %v1142 = vpop.permute.xlu0 %1141
        %1145 = vset.pattern.permute.xlu0 0
        %1146 = vperm.xlu0 %1145, %v876
        %v1147 = vpop.permute.xlu0 %1146
        %1150 = vset.pattern.permute.xlu0 0
        %1151 = vperm.xlu0 %1150, %v877
        %v1152 = vpop.permute.xlu0 %1151
        %1155 = vset.pattern.permute.xlu0 0
        %1156 = vperm.xlu0 %1155, %v878
        %v1157 = vpop.permute.xlu0 %1156
        %1160 = vset.pattern.permute.xlu0 0
        %1161 = vperm.xlu0 %1160, %v879
        %v1162 = vpop.permute.xlu0 %1161
        %1165 = vset.pattern.permute.xlu0 0
        %1166 = vperm.xlu0 %1165, %v880
        %v1167 = vpop.permute.xlu0 %1166
        %1170 = vset.pattern.permute.xlu0 0
        %1171 = vperm.xlu0 %1170, %v881
        %v1172 = vpop.permute.xlu0 %1171
        %1175 = vset.pattern.permute.xlu0 0
        %1176 = vperm.xlu0 %1175, %v882
        %v1177 = vpop.permute.xlu0 %1176
        %1180 = vset.pattern.permute.xlu0 0
        %1181 = vperm.xlu0 %1180, %v883
        %v1182 = vpop.permute.xlu0 %1181
        %1185 = vset.pattern.permute.xlu0 0
        %1186 = vperm.xlu0 %1185, %v884
        %v1187 = vpop.permute.xlu0 %1186
        %1190 = vset.pattern.permute.xlu0 0
        %1191 = vperm.xlu0 %1190, %v885
        %v1192 = vpop.permute.xlu0 %1191
        %1195 = vset.pattern.permute.xlu0 0
        %1196 = vperm.xlu0 %1195, %v886
        %v1197 = vpop.permute.xlu0 %1196
        %1200 = vset.pattern.permute.xlu0 0
        %1201 = vperm.xlu0 %1200, %v887
        %v1202 = vpop.permute.xlu0 %1201
        %1205 = vset.pattern.permute.xlu0 0
        %1206 = vperm.xlu0 %1205, %v888
        %v1207 = vpop.permute.xlu0 %1206
        %v1209 = vmul.f32 %v761, %v892
        %v1210 = vmul.f32 %v762, %v897
        %v1211 = vmul.f32 %v763, %v902
        %v1212 = vmul.f32 %v764, %v907
        %v1213 = vmul.f32 %v765, %v912
        %v1214 = vmul.f32 %v766, %v917
        %v1215 = vmul.f32 %v767, %v922
        %v1216 = vmul.f32 %v768, %v927
        %v1217 = vmul.f32 %v769, %v932
        %v1218 = vmul.f32 %v770, %v937
        %v1219 = vmul.f32 %v771, %v942
        %v1220 = vmul.f32 %v772, %v947
        %v1221 = vmul.f32 %v773, %v952
        %v1222 = vmul.f32 %v774, %v957
        %v1223 = vmul.f32 %v775, %v962
        %v1224 = vmul.f32 %v776, %v967
        %v1225 = vmul.f32 %v777, %v972
        %v1226 = vmul.f32 %v778, %v977
        %v1227 = vmul.f32 %v779, %v982
        %v1228 = vmul.f32 %v780, %v987
        %v1229 = vmul.f32 %v781, %v992
        %v1230 = vmul.f32 %v782, %v997
        %v1231 = vmul.f32 %v783, %v1002
        %v1232 = vmul.f32 %v784, %v1007
        %v1233 = vmul.f32 %v785, %v1012
        %v1234 = vmul.f32 %v786, %v1017
        %v1235 = vmul.f32 %v787, %v1022
        %v1236 = vmul.f32 %v788, %v1027
        %v1237 = vmul.f32 %v789, %v1032
        %v1238 = vmul.f32 %v790, %v1037
        %v1239 = vmul.f32 %v791, %v1042
        %v1240 = vmul.f32 %v792, %v1047
        %v1241 = vmul.f32 %v793, %v1052
        %v1242 = vmul.f32 %v794, %v1057
        %v1243 = vmul.f32 %v795, %v1062
        %v1244 = vmul.f32 %v796, %v1067
        %v1245 = vmul.f32 %v797, %v1072
        %v1246 = vmul.f32 %v798, %v1077
        %v1247 = vmul.f32 %v799, %v1082
        %v1248 = vmul.f32 %v800, %v1087
        %v1249 = vmul.f32 %v801, %v1092
        %v1250 = vmul.f32 %v802, %v1097
        %v1251 = vmul.f32 %v803, %v1102
        %v1252 = vmul.f32 %v804, %v1107
        %v1253 = vmul.f32 %v805, %v1112
        %v1254 = vmul.f32 %v806, %v1117
        %v1255 = vmul.f32 %v807, %v1122
        %v1256 = vmul.f32 %v808, %v1127
        %v1257 = vmul.f32 %v809, %v1132
        %v1258 = vmul.f32 %v810, %v1137
        %v1259 = vmul.f32 %v811, %v1142
        %v1260 = vmul.f32 %v812, %v1147
        %v1261 = vmul.f32 %v813, %v1152
        %v1262 = vmul.f32 %v814, %v1157
        %v1263 = vmul.f32 %v815, %v1162
        %v1264 = vmul.f32 %v816, %v1167
        %v1265 = vmul.f32 %v817, %v1172
        %v1266 = vmul.f32 %v818, %v1177
        %v1267 = vmul.f32 %v819, %v1182
        %v1268 = vmul.f32 %v820, %v1187
        %v1269 = vmul.f32 %v821, %v1192
        %v1270 = vmul.f32 %v822, %v1197
        %v1271 = vmul.f32 %v823, %v1202
        %v1272 = vmul.f32 %v824, %v1207
        %v1273 = vpack.c.bf16 %v1210, %v1209
        %v1274 = vpack.c.bf16 %v1212, %v1211
        %v1275 = vpack.c.bf16 %v1214, %v1213
        %v1276 = vpack.c.bf16 %v1216, %v1215
        %v1277 = vpack.c.bf16 %v1218, %v1217
        %v1278 = vpack.c.bf16 %v1220, %v1219
        %v1279 = vpack.c.bf16 %v1222, %v1221
        %v1280 = vpack.c.bf16 %v1224, %v1223
        %v1281 = vpack.c.bf16 %v1226, %v1225
        %v1282 = vpack.c.bf16 %v1228, %v1227
        %v1283 = vpack.c.bf16 %v1230, %v1229
        %v1284 = vpack.c.bf16 %v1232, %v1231
        %v1285 = vpack.c.bf16 %v1234, %v1233
        %v1286 = vpack.c.bf16 %v1236, %v1235
        %v1287 = vpack.c.bf16 %v1238, %v1237
        %v1288 = vpack.c.bf16 %v1240, %v1239
        %v1289 = vpack.c.bf16 %v1242, %v1241
        %v1290 = vpack.c.bf16 %v1244, %v1243
        %v1291 = vpack.c.bf16 %v1246, %v1245
        %v1292 = vpack.c.bf16 %v1248, %v1247
        %v1293 = vpack.c.bf16 %v1250, %v1249
        %v1294 = vpack.c.bf16 %v1252, %v1251
        %v1295 = vpack.c.bf16 %v1254, %v1253
        %v1296 = vpack.c.bf16 %v1256, %v1255
        %v1297 = vpack.c.bf16 %v1258, %v1257
        %v1298 = vpack.c.bf16 %v1260, %v1259
        %v1299 = vpack.c.bf16 %v1262, %v1261
        %v1300 = vpack.c.bf16 %v1264, %v1263
        %v1301 = vpack.c.bf16 %v1266, %v1265
        %v1302 = vpack.c.bf16 %v1268, %v1267
        %v1303 = vpack.c.bf16 %v1270, %v1269
        %v1304 = vpack.c.bf16 %v1272, %v1271
        %v1337 = vunpack.c.l.b16 %v1273
        %v1338 = vunpack.c.h.b16 %v1273
        %v1339 = vunpack.c.l.b16 %v1274
        %v1340 = vunpack.c.h.b16 %v1274
        %v1341 = vunpack.c.l.b16 %v1275
        %v1342 = vunpack.c.h.b16 %v1275
        %v1343 = vunpack.c.l.b16 %v1276
        %v1344 = vunpack.c.h.b16 %v1276
        %v1345 = vunpack.c.l.b16 %v1277
        %v1346 = vunpack.c.h.b16 %v1277
        %v1347 = vunpack.c.l.b16 %v1278
        %v1348 = vunpack.c.h.b16 %v1278
        %v1349 = vunpack.c.l.b16 %v1279
        %v1350 = vunpack.c.h.b16 %v1279
        %v1351 = vunpack.c.l.b16 %v1280
        %v1352 = vunpack.c.h.b16 %v1280
        %v1353 = vunpack.c.l.b16 %v1281
        %v1354 = vunpack.c.h.b16 %v1281
        %v1355 = vunpack.c.l.b16 %v1282
        %v1356 = vunpack.c.h.b16 %v1282
        %v1357 = vunpack.c.l.b16 %v1283
        %v1358 = vunpack.c.h.b16 %v1283
        %v1359 = vunpack.c.l.b16 %v1284
        %v1360 = vunpack.c.h.b16 %v1284
        %v1361 = vunpack.c.l.b16 %v1285
        %v1362 = vunpack.c.h.b16 %v1285
        %v1363 = vunpack.c.l.b16 %v1286
        %v1364 = vunpack.c.h.b16 %v1286
        %v1365 = vunpack.c.l.b16 %v1287
        %v1366 = vunpack.c.h.b16 %v1287
        %v1367 = vunpack.c.l.b16 %v1288
        %v1368 = vunpack.c.h.b16 %v1288
        %v1369 = vunpack.c.l.b16 %v1289
        %v1370 = vunpack.c.h.b16 %v1289
        %v1371 = vunpack.c.l.b16 %v1290
        %v1372 = vunpack.c.h.b16 %v1290
        %v1373 = vunpack.c.l.b16 %v1291
        %v1374 = vunpack.c.h.b16 %v1291
        %v1375 = vunpack.c.l.b16 %v1292
        %v1376 = vunpack.c.h.b16 %v1292
        %v1377 = vunpack.c.l.b16 %v1293
        %v1378 = vunpack.c.h.b16 %v1293
        %v1379 = vunpack.c.l.b16 %v1294
        %v1380 = vunpack.c.h.b16 %v1294
        %v1381 = vunpack.c.l.b16 %v1295
        %v1382 = vunpack.c.h.b16 %v1295
        %v1383 = vunpack.c.l.b16 %v1296
        %v1384 = vunpack.c.h.b16 %v1296
        %v1385 = vunpack.c.l.b16 %v1297
        %v1386 = vunpack.c.h.b16 %v1297
        %v1387 = vunpack.c.l.b16 %v1298
        %v1388 = vunpack.c.h.b16 %v1298
        %v1389 = vunpack.c.l.b16 %v1299
        %v1390 = vunpack.c.h.b16 %v1299
        %v1391 = vunpack.c.l.b16 %v1300
        %v1392 = vunpack.c.h.b16 %v1300
        %v1393 = vunpack.c.l.b16 %v1301
        %v1394 = vunpack.c.h.b16 %v1301
        %v1395 = vunpack.c.l.b16 %v1302
        %v1396 = vunpack.c.h.b16 %v1302
        %v1397 = vunpack.c.l.b16 %v1303
        %v1398 = vunpack.c.h.b16 %v1303
        %v1399 = vunpack.c.l.b16 %v1304
        %v1400 = vunpack.c.h.b16 %v1304
        %v1401 = vpack.c.b16 %v1337, %v1337
        %v1402 = vpack.c.b16 %v1338, %v1338
        %v1403 = vpack.c.b16 %v1339, %v1339
        %v1404 = vpack.c.b16 %v1340, %v1340
        %v1405 = vpack.c.b16 %v1341, %v1341
        %v1406 = vpack.c.b16 %v1342, %v1342
        %v1407 = vpack.c.b16 %v1343, %v1343
        %v1408 = vpack.c.b16 %v1344, %v1344
        %v1409 = vpack.c.b16 %v1345, %v1345
        %v1410 = vpack.c.b16 %v1346, %v1346
        %v1411 = vpack.c.b16 %v1347, %v1347
        %v1412 = vpack.c.b16 %v1348, %v1348
        %v1413 = vpack.c.b16 %v1349, %v1349
        %v1414 = vpack.c.b16 %v1350, %v1350
        %v1415 = vpack.c.b16 %v1351, %v1351
        %v1416 = vpack.c.b16 %v1352, %v1352
        %v1417 = vpack.c.b16 %v1353, %v1353
        %v1418 = vpack.c.b16 %v1354, %v1354
        %v1419 = vpack.c.b16 %v1355, %v1355
        %v1420 = vpack.c.b16 %v1356, %v1356
        %v1421 = vpack.c.b16 %v1357, %v1357
        %v1422 = vpack.c.b16 %v1358, %v1358
        %v1423 = vpack.c.b16 %v1359, %v1359
        %v1424 = vpack.c.b16 %v1360, %v1360
        %v1425 = vpack.c.b16 %v1361, %v1361
        %v1426 = vpack.c.b16 %v1362, %v1362
        %v1427 = vpack.c.b16 %v1363, %v1363
        %v1428 = vpack.c.b16 %v1364, %v1364
        %v1429 = vpack.c.b16 %v1365, %v1365
        %v1430 = vpack.c.b16 %v1366, %v1366
        %v1431 = vpack.c.b16 %v1367, %v1367
        %v1432 = vpack.c.b16 %v1368, %v1368
        %v1433 = vpack.c.b16 %v1369, %v1369
        %v1434 = vpack.c.b16 %v1370, %v1370
        %v1435 = vpack.c.b16 %v1371, %v1371
        %v1436 = vpack.c.b16 %v1372, %v1372
        %v1437 = vpack.c.b16 %v1373, %v1373
        %v1438 = vpack.c.b16 %v1374, %v1374
        %v1439 = vpack.c.b16 %v1375, %v1375
        %v1440 = vpack.c.b16 %v1376, %v1376
        %v1441 = vpack.c.b16 %v1377, %v1377
        %v1442 = vpack.c.b16 %v1378, %v1378
        %v1443 = vpack.c.b16 %v1379, %v1379
        %v1444 = vpack.c.b16 %v1380, %v1380
        %v1445 = vpack.c.b16 %v1381, %v1381
        %v1446 = vpack.c.b16 %v1382, %v1382
        %v1447 = vpack.c.b16 %v1383, %v1383
        %v1448 = vpack.c.b16 %v1384, %v1384
        %v1449 = vpack.c.b16 %v1385, %v1385
        %v1450 = vpack.c.b16 %v1386, %v1386
        %v1451 = vpack.c.b16 %v1387, %v1387
        %v1452 = vpack.c.b16 %v1388, %v1388
        %v1453 = vpack.c.b16 %v1389, %v1389
        %v1454 = vpack.c.b16 %v1390, %v1390
        %v1455 = vpack.c.b16 %v1391, %v1391
        %v1456 = vpack.c.b16 %v1392, %v1392
        %v1457 = vpack.c.b16 %v1393, %v1393
        %v1458 = vpack.c.b16 %v1394, %v1394
        %v1459 = vpack.c.b16 %v1395, %v1395
        %v1460 = vpack.c.b16 %v1396, %v1396
        %v1461 = vpack.c.b16 %v1397, %v1397
        %v1462 = vpack.c.b16 %v1398, %v1398
        %v1463 = vpack.c.b16 %v1399, %v1399
        %v1464 = vpack.c.b16 %v1400, %v1400
        %1529 = vst [vmem:[%s245] sm:$0xf] %v1401
        %1530 = vst [vmem:[%s245 + $0x4] sm:$0xf] %v1402
        %1531 = vst [vmem:[%s245 + $0x8] sm:$0xf] %v1403
        %1532 = vst [vmem:[%s245 + $0xc] sm:$0xf] %v1404
        %1533 = vst [vmem:[%s245 + $0x10] sm:$0xf] %v1405
        %1534 = vst [vmem:[%s245 + $0x14] sm:$0xf] %v1406
        %1535 = vst [vmem:[%s245 + $0x18] sm:$0xf] %v1407
        %1536 = vst [vmem:[%s245 + $0x1c] sm:$0xf] %v1408
        %1537 = vst [vmem:[%s245 + $0x20] sm:$0xf] %v1409
        %1538 = vst [vmem:[%s245 + $0x24] sm:$0xf] %v1410
        %1539 = vst [vmem:[%s245 + $0x28] sm:$0xf] %v1411
        %1540 = vst [vmem:[%s245 + $0x2c] sm:$0xf] %v1412
        %1541 = vst [vmem:[%s245 + $0x30] sm:$0xf] %v1413
        %1542 = vst [vmem:[%s245 + $0x34] sm:$0xf] %v1414
        %1543 = vst [vmem:[%s245 + $0x38] sm:$0xf] %v1415
        %1544 = vst [vmem:[%s245 + $0x3c] sm:$0xf] %v1416
        %1545 = vst [vmem:[%s245 + $0x40] sm:$0xf] %v1417
        %1546 = vst [vmem:[%s245 + $0x44] sm:$0xf] %v1418
        %1547 = vst [vmem:[%s245 + $0x48] sm:$0xf] %v1419
        %1548 = vst [vmem:[%s245 + $0x4c] sm:$0xf] %v1420
        %1549 = vst [vmem:[%s245 + $0x50] sm:$0xf] %v1421
        %1550 = vst [vmem:[%s245 + $0x54] sm:$0xf] %v1422
        %1551 = vst [vmem:[%s245 + $0x58] sm:$0xf] %v1423
        %1552 = vst [vmem:[%s245 + $0x5c] sm:$0xf] %v1424
        %1553 = vst [vmem:[%s245 + $0x60] sm:$0xf] %v1425
        %1554 = vst [vmem:[%s245 + $0x64] sm:$0xf] %v1426
        %1555 = vst [vmem:[%s245 + $0x68] sm:$0xf] %v1427
        %1556 = vst [vmem:[%s245 + $0x6c] sm:$0xf] %v1428
        %1557 = vst [vmem:[%s245 + $0x70] sm:$0xf] %v1429
        %1558 = vst [vmem:[%s245 + $0x74] sm:$0xf] %v1430
        %1559 = vst [vmem:[%s245 + $0x78] sm:$0xf] %v1431
        %1560 = vst [vmem:[%s245 + $0x7c] sm:$0xf] %v1432
        %1561 = vst [vmem:[%s245 + $0x80] sm:$0xf] %v1433
        %1562 = vst [vmem:[%s245 + $0x84] sm:$0xf] %v1434
        %1563 = vst [vmem:[%s245 + $0x88] sm:$0xf] %v1435
        %1564 = vst [vmem:[%s245 + $0x8c] sm:$0xf] %v1436
        %1565 = vst [vmem:[%s245 + $0x90] sm:$0xf] %v1437
        %1566 = vst [vmem:[%s245 + $0x94] sm:$0xf] %v1438
        %1567 = vst [vmem:[%s245 + $0x98] sm:$0xf] %v1439
        %1568 = vst [vmem:[%s245 + $0x9c] sm:$0xf] %v1440
        %1569 = vst [vmem:[%s245 + $0xa0] sm:$0xf] %v1441
        %1570 = vst [vmem:[%s245 + $0xa4] sm:$0xf] %v1442
        %1571 = vst [vmem:[%s245 + $0xa8] sm:$0xf] %v1443
        %1572 = vst [vmem:[%s245 + $0xac] sm:$0xf] %v1444
        %1573 = vst [vmem:[%s245 + $0xb0] sm:$0xf] %v1445
        %1574 = vst [vmem:[%s245 + $0xb4] sm:$0xf] %v1446
        %1575 = vst [vmem:[%s245 + $0xb8] sm:$0xf] %v1447
        %1576 = vst [vmem:[%s245 + $0xbc] sm:$0xf] %v1448
        %1577 = vst [vmem:[%s245 + $0xc0] sm:$0xf] %v1449
        %1578 = vst [vmem:[%s245 + $0xc4] sm:$0xf] %v1450
        %1579 = vst [vmem:[%s245 + $0xc8] sm:$0xf] %v1451
        %1580 = vst [vmem:[%s245 + $0xcc] sm:$0xf] %v1452
        %1581 = vst [vmem:[%s245 + $0xd0] sm:$0xf] %v1453
        %1582 = vst [vmem:[%s245 + $0xd4] sm:$0xf] %v1454
        %1583 = vst [vmem:[%s245 + $0xd8] sm:$0xf] %v1455
        %1584 = vst [vmem:[%s245 + $0xdc] sm:$0xf] %v1456
        %1585 = vst [vmem:[%s245 + $0xe0] sm:$0xf] %v1457
        %1586 = vst [vmem:[%s245 + $0xe4] sm:$0xf] %v1458
        %1587 = vst [vmem:[%s245 + $0xe8] sm:$0xf] %v1459
        %1588 = vst [vmem:[%s245 + $0xec] sm:$0xf] %v1460
        %1589 = vst [vmem:[%s245 + $0xf0] sm:$0xf] %v1461
        %1590 = vst [vmem:[%s245 + $0xf4] sm:$0xf] %v1462
        %1591 = vst [vmem:[%s245 + $0xf8] sm:$0xf] %v1463
        %1592 = vst [vmem:[%s245 + $0xfc] sm:$0xf] %v1464
        %s1593 = sand.u32 %s144, 1
        %s1594 = scalar_lea.sflag [#allocation3], %s1593
        %s1595 = sand.u32 %s144, 1
        %s1596 = smul.addr %s1595, 256
        %s1597 = scalar_lea.vmem [#allocation2], %s1596
        // Predicated region
        $region37: #{tpu_custom_call.1} parent=35 // pred_check
          %p1598 = pneg %p154
        $region38: #{tpu_custom_call.1} parent=35 // pred_check_branch
          %1600 = sbr.rel (%p1598) target = $region40
        $region39: #{tpu_custom_call.1} parent=35 // pred_region
          %s1601 = smul.u32 64, %s22
          %s1603 = ssub.s32 4096, 4096
          %1604 = vsyncadd %s1594, %s1603
          %s1605 = sadd.s32 %s23, %s1601
          %s1606 = smul.addr %s1605, 64
          %s1607 = scalar_lea.hbm %s4, %s1606
          %s1608 = sshll.u32 %s1597, 4
          %s1609 = int_to_ptr.vmem [resolvable:$true] %s1608
          %1614 = dma.vmem_to_hbm [thread:$0]  %s1609, 4096, %s1607, %s1594, 64, 64, 4
        $region40: #{tpu_custom_call.1} parent=35 // pred_fallthru
          _
      $region36: #{tpu_custom_call.1} parent=5 // pred_fallthru
        _
      %p1615 = scmp.le.s32.totalorder 2, %s13
      // Predicated region
      $region41: #{tpu_custom_call.1} parent=5 // pred_check
        %p1616 = pneg %p1615
      $region42: #{tpu_custom_call.1} parent=5 // pred_check_branch
        %1618 = sbr.rel (%p1616) target = $region44
      $region43: #{tpu_custom_call.1} parent=5 // pred_region
        %s1619 = ssub.s32 %s13, 2
        // Predicated region
        $region45: #{tpu_custom_call.1} parent=43 // pred_check
          %p1620 = pneg %p160
        $region46: #{tpu_custom_call.1} parent=43 // pred_check_branch
          %1622 = sbr.rel (%p1620) target = $region48
        $region47: #{tpu_custom_call.1} parent=43 // pred_region
          %s1623 = sand.u32 %s145, 1
          %s1624 = scalar_lea.sflag [#allocation3], %s1623
          %s1625 = sand.u32 %s145, 1
          %s1626 = smul.addr %s1625, 256
          %s1627 = scalar_lea.vmem [#allocation2], %s1626
          %1628 = dma.done %s1624, 4096
        $region48: #{tpu_custom_call.1} parent=43 // pred_fallthru
          _
      $region44: #{tpu_custom_call.1} parent=5 // pred_fallthru
        _
    $region6: #{tpu_custom_call.1} parent=1 // loop_footer
      %s17 = sadd.s32 1, %s13
    $region7: #{tpu_custom_call.1} parent=1 // loop_footer_branch
      %12 = sbr.rel target = $region3
    $region8: #{tpu_custom_call.1} parent=1 // loop_exit
      _
    %1629 = vsyncpa [#allocation3], 1
    %s1630 = scalar_lea.sflag [#allocation3], 1
    %1631 = vsyncpa %s1630, 1

</llo_original>
